<compile_context>
chip_gen: v6e
topology: v6e:2x2x1
jax: 0.10.0
libtpu: 0.0.40
codegen_flags: <defaults>
</compile_context>

<pallas_src>
import jax
import jax.numpy as jnp
import numpy as np
from jax import lax
from jax.experimental import pallas as pl
from jax.experimental.pallas import tpu as pltpu

IN_CH = 2
FC_OUT = 16
FC_PAD = 128            # fc feature dim padded to a full lane width (canonical MXU shape)
HID = 128
OUT_CH = 2
OUT_PAD = 128           # head output channels padded to a full lane width


# --------------------------------------------------------------------------- #
# Fused kernel: per-chunk input projection + serial LSTM recurrence + MLP head
# --------------------------------------------------------------------------- #
def _make_decoder_kernel(T, TT, B_pad, unroll):
    """Build the fused kernel for static (T, TT, B_pad)."""
    three_h = 3 * HID

    def kernel(fc_ref, h0_ref, c0_ref, wih_ref, whh_ref, bg_ref,
               w1_ref, b1_ref, w2_ref, b2_ref,
               y_ref, hn_ref, cn_ref,
               h_carry, c_carry, gx_buf, h_buf):
        chunk = pl.program_id(0)

        # ---- first chunk: load the initial hidden state into the carry ---- #
        @pl.when(chunk == 0)
        def _():
            h_carry[...] = h0_ref[...]
            c_carry[...] = c0_ref[...]

        # ---- non-recurrent input projection for the whole chunk (hoisted
        #      off the serial path): gates_x = fc @ W_ih + (b_ih + b_hh) ----- #
        gx_buf[...] = (jnp.dot(fc_ref[...], wih_ref[...],
                               preferred_element_type=jnp.float32)
                       + bg_ref[...])

        whh = whh_ref[...]                                  # (HID, 4*HID), hoisted

        # ---- serial LSTM recurrence over this chunk ------------------------ #
        def step(t, carry):
            h_prev, c_prev = carry
            r = pl.multiple_of(t * B_pad, B_pad)            # sublane-aligned row
            gates = gx_buf[pl.ds(r, B_pad), :] + jnp.dot(
                h_prev, whh, preferred_element_type=jnp.float32)
            # gate order is [i, f, o, g]: one sigmoid slab + one tanh (v5e EUP)
            ifo = jax.nn.sigmoid(gates[:, :three_h])
            i_g = ifo[:, 0 * HID:1 * HID]
            f_g = ifo[:, 1 * HID:2 * HID]
            o_g = ifo[:, 2 * HID:3 * HID]
            g_g = jnp.tanh(gates[:, three_h:])
            c_new = f_g * c_prev + i_g * g_g
            h_new = o_g * jnp.tanh(c_new)
            if T % TT != 0:
                # mask padded trailing timesteps so h_n / c_n stay exact
                valid = (chunk * TT + t) < T
                h_new = jnp.where(valid, h_new, h_prev)
                c_new = jnp.where(valid, c_new, c_prev)
            h_buf[pl.ds(r, B_pad), :] = h_new
            return (h_new, c_new)

        h_T, c_T = lax.fori_loop(0, TT, step,
                                 (h_carry[...], c_carry[...]), unroll=unroll)
        h_carry[...] = h_T
        c_carry[...] = c_T

        # ---- fused MLP head on the VMEM-resident h chunk (batched rows) ---- #
        z = jnp.dot(h_buf[...], w1_ref[...],
                    preferred_element_type=jnp.float32) + b1_ref[...]
        z = jnp.maximum(z, 0.0)
        y_ref[...] = (jnp.dot(z, w2_ref[...],
                              preferred_element_type=jnp.float32)
                      + b2_ref[...]).astype(y_ref.dtype)

        # ---- last chunk: emit final hidden state --------------------------- #
        @pl.when(chunk == pl.num_programs(0) - 1)
        def _():
            hn_ref[...] = h_T
            cn_ref[...] = c_T

    return kernel


def _reorder_gates(w):
    """Reorder gate blocks along the last axis: [i, f, g, o] -> [i, f, o, g]."""
    i, f, g, o = jnp.split(w, 4, axis=-1)
    return jnp.concatenate([i, f, o, g], axis=-1)


# --------------------------------------------------------------------------- #
# Wrapper: PyTorch-compatible forward
# --------------------------------------------------------------------------- #
def decoder_forward(x_btc, hidden, params):
    """x_btc: (B, T, IN_CH) batch_first; hidden = (h0, c0), each (1, B, HID)."""
    h0, c0 = hidden
    B, T, _ = x_btc.shape
    if T == 0:  # degenerate: nothing to decode, hidden passes through
        return jnp.zeros((B, 0, OUT_CH), jnp.float32), (h0, c0)

    wl, bl, wih, whh, bg, w1, b1, w2, b2 = params

    # ---- static tiling choices --------------------------------------------- #
    B_pad = ((B + 7) // 8) * 8            # full sublane groups
    TT = T if T < 64 else 64              # time tile: VMEM bounded by TT, not T
    num_chunks = (T + TT - 1) // TT
    T_pad = num_chunks * TT
    unroll = min(TT, 8)                   # bounded unroll (LLO visibility, no blow-up)
    rows = TT * B_pad

    # ---- wrapper-side prep (non-recurrent, batched over T*B) --------------- #
    x_tm = jnp.transpose(x_btc, (1, 0, 2))                          # (T, B, IN)
    x_tm = jnp.pad(x_tm, ((0, T_pad - T), (0, B_pad - B), (0, 0)))
    fc = jnp.einsum('tbi,if->tbf', x_tm, wl) + bl                   # (T_pad, B_pad, 16)
    fc = jnp.pad(fc, ((0, 0), (0, 0), (0, FC_PAD - FC_OUT)))        # pad to 128 lanes
    fc_flat = fc.reshape(T_pad * B_pad, FC_PAD)

    h0_p = jnp.pad(h0[0], ((0, B_pad - B), (0, 0)))                 # (B_pad, HID)
    c0_p = jnp.pad(c0[0], ((0, B_pad - B), (0, 0)))

    wih_k = jnp.pad(_reorder_gates(wih), ((0, FC_PAD - FC_OUT), (0, 0)))  # (128, 512)
    whh_k = _reorder_gates(whh)                                     # (HID, 512)
    bg_k = _reorder_gates(bg)                                       # (1, 512)
    w2_p = jnp.pad(w2, ((0, 0), (0, OUT_PAD - OUT_CH)))             # (HID, 128)
    b2_p = jnp.pad(b2, ((0, 0), (0, OUT_PAD - OUT_CH)))             # (1, 128)

    kernel = _make_decoder_kernel(T, TT, B_pad, unroll)

    y_flat, h_n, c_n = pl.pallas_call(
        kernel,
        out_shape=(
            jax.ShapeDtypeStruct((T_pad * B_pad, OUT_PAD), jnp.float32),
            jax.ShapeDtypeStruct((B_pad, HID), jnp.float32),
            jax.ShapeDtypeStruct((B_pad, HID), jnp.float32),
        ),
        grid_spec=pltpu.PrefetchScalarGridSpec(
            num_scalar_prefetch=0,
            grid=(num_chunks,),
            in_specs=[
                pl.BlockSpec((rows, FC_PAD), lambda t: (t, 0)),      # fc stream
                pl.BlockSpec((B_pad, HID), lambda t: (0, 0)),        # h0
                pl.BlockSpec((B_pad, HID), lambda t: (0, 0)),        # c0
                pl.BlockSpec((FC_PAD, 4 * HID), lambda t: (0, 0)),   # W_ih^T (reordered)
                pl.BlockSpec((HID, 4 * HID), lambda t: (0, 0)),      # W_hh^T (reordered)
                pl.BlockSpec((1, 4 * HID), lambda t: (0, 0)),        # b_ih + b_hh
                pl.BlockSpec((HID, HID), lambda t: (0, 0)),          # W1^T
                pl.BlockSpec((1, HID), lambda t: (0, 0)),            # b1
                pl.BlockSpec((HID, OUT_PAD), lambda t: (0, 0)),      # W2^T (padded)
                pl.BlockSpec((1, OUT_PAD), lambda t: (0, 0)),        # b2 (padded)
            ],
            out_specs=[
                pl.BlockSpec((rows, OUT_PAD), lambda t: (t, 0)),     # y (lane-dense)
                pl.BlockSpec((B_pad, HID), lambda t: (0, 0)),        # h_n
                pl.BlockSpec((B_pad, HID), lambda t: (0, 0)),        # c_n
            ],
            scratch_shapes=[
                pltpu.VMEM((B_pad, HID), jnp.float32),               # h carry
                pltpu.VMEM((B_pad, HID), jnp.float32),               # c carry
                pltpu.VMEM((rows, 4 * HID), jnp.float32),            # gates_x chunk
                pltpu.VMEM((rows, HID), jnp.float32),                # h chunk (head input)
            ],
        ),
        compiler_params=pltpu.CompilerParams(
            # The serial recurrence cannot be split over time; for B_pad > 8 a
            # leading "parallel" batch-block grid axis would shard it across
            # v7x's two TensorCores.
            dimension_semantics=("arbitrary",)),
    )(fc_flat, h0_p, c0_p, wih_k, whh_k, bg_k, w1, b1, w2_p, b2_p)

    y = y_flat.reshape(T_pad, B_pad, OUT_PAD)[:T, :B, :OUT_CH]       # (T, B, OUT)
    y = jnp.transpose(y, (1, 0, 2))                                  # (B, T, OUT)
    return y, (h_n[:B][None], c_n[:B][None])


# --------------------------------------------------------------------------- #
# Pure-JAX reference (mirrors PyTorch semantics, canonical [i,f,g,o] gates)
# --------------------------------------------------------------------------- #
def decoder_ref(x_btc, hidden, params):
    wl, bl, wih, whh, bg, w1, b1, w2, b2 = params
    h0, c0 = hidden
    x_tm = jnp.transpose(x_btc, (1, 0, 2))

    def step(carry, x_t):
        h, c = carry
        fc = x_t @ wl + bl
        gates = fc @ wih + h @ whh + bg
        i = jax.nn.sigmoid(gates[:, 0 * HID:1 * HID])
        f = jax.nn.sigmoid(gates[:, 1 * HID:2 * HID])
        g = jnp.tanh(gates[:, 2 * HID:3 * HID])
        o = jax.nn.sigmoid(gates[:, 3 * HID:4 * HID])
        c = f * c + i * g
        h = o * jnp.tanh(c)
        y = jnp.maximum(h @ w1 + b1, 0.0) @ w2 + b2
        return (h, c), y

    (hT, cT), ys = lax.scan(step, (h0[0], c0[0]), x_tm)
    return jnp.transpose(ys, (1, 0, 2)), (hT[None], cT[None])


def init_params(key):
    ks = jax.random.split(key, 9)
    scale = 0.1
    # Stored pre-transposed: y = x @ W^T + b  ->  pass W^T directly.
    # Gate layout along the 4*HID axis is PyTorch-canonical [i, f, g, o].
    wl = scale * jax.random.normal(ks[0], (IN_CH, FC_OUT), jnp.float32)
    bl = scale * jax.random.normal(ks[1], (1, FC_OUT), jnp.float32)
    wih = scale * jax.random.normal(ks[2], (FC_OUT, 4 * HID), jnp.float32)
    whh = scale * jax.random.normal(ks[3], (HID, 4 * HID), jnp.float32)
    bg = scale * jax.random.normal(ks[4], (1, 4 * HID), jnp.float32)  # b_ih + b_hh folded
    w1 = scale * jax.random.normal(ks[5], (HID, HID), jnp.float32)
    b1 = scale * jax.random.normal(ks[6], (1, HID), jnp.float32)
    w2 = scale * jax.random.normal(ks[7], (HID, OUT_CH), jnp.float32)
    b2 = scale * jax.random.normal(ks[8], (1, OUT_CH), jnp.float32)
    return (wl, bl, wih, whh, bg, w1, b1, w2, b2)


if __name__ == "__main__":
    B, T = 2, 8
    key = jax.random.PRNGKey(0)
    kx, kh, kc, kp = jax.random.split(key, 4)

    x = jax.random.normal(kx, (B, T, IN_CH), jnp.float32)
    h0 = jax.random.normal(kh, (1, B, HID), jnp.float32)
    c0 = jax.random.normal(kc, (1, B, HID), jnp.float32)
    params = init_params(kp)

    out, (h_n, c_n) = decoder_forward(x, (h0, c0), params)
    jax.block_until_ready((out, h_n, c_n))

    ref_out, (ref_h, ref_c) = decoder_ref(x, (h0, c0), params)
    # Both paths now use DEFAULT (single bf16-pass) MXU precision, so the
    # comparison tolerance is loosened vs. the previous 'highest'-precision run.
    np.testing.assert_allclose(np.asarray(out), np.asarray(ref_out), rtol=5e-2, atol=5e-2)
    np.testing.assert_allclose(np.asarray(h_n), np.asarray(ref_h), rtol=5e-2, atol=5e-2)
    np.testing.assert_allclose(np.asarray(c_n), np.asarray(ref_c), rtol=5e-2, atol=5e-2)

    assert out.shape == (B, T, OUT_CH)
    assert h_n.shape == (1, B, HID) and c_n.shape == (1, B, HID)
    print("KERNEL_OK")
</pallas_src>

<mosaic_0001>
module attributes {stable_mosaic.version = 11 : i64} {
  func.func @kernel(%arg0: i32, %arg1: memref<64x128xf32, #tpu.memory_space<vmem>>, %arg2: memref<8x128xf32, #tpu.memory_space<vmem>>, %arg3: memref<8x128xf32, #tpu.memory_space<vmem>>, %arg4: memref<128x512xf32, #tpu.memory_space<vmem>>, %arg5: memref<128x512xf32, #tpu.memory_space<vmem>>, %arg6: memref<1x512xf32, #tpu.memory_space<vmem>>, %arg7: memref<128x128xf32, #tpu.memory_space<vmem>>, %arg8: memref<1x128xf32, #tpu.memory_space<vmem>>, %arg9: memref<128x128xf32, #tpu.memory_space<vmem>>, %arg10: memref<1x128xf32, #tpu.memory_space<vmem>>, %arg11: memref<64x128xf32, #tpu.memory_space<vmem>>, %arg12: memref<8x128xf32, #tpu.memory_space<vmem>>, %arg13: memref<8x128xf32, #tpu.memory_space<vmem>>, %arg14: memref<8x128xf32, #tpu.memory_space<vmem>>, %arg15: memref<8x128xf32, #tpu.memory_space<vmem>>, %arg16: memref<64x512xf32, #tpu.memory_space<vmem>>, %arg17: memref<64x128xf32, #tpu.memory_space<vmem>>) attributes {dimension_semantics = [#tpu.dimension_semantics<arbitrary>], iteration_bounds = array<i64: 1>, scalar_prefetch = 0 : i64, scratch_operands = 4 : i64, tpu.core_type = #tpu.core_type<tc>, window_params = [{transform_indices = @transform_0, window_bounds = array<i64: 64, 128>}, {pipeline_mode = #tpu.pipeline_mode<synchronous>, transform_indices = @transform_1, window_bounds = array<i64: 8, 128>}, {pipeline_mode = #tpu.pipeline_mode<synchronous>, transform_indices = @transform_2, window_bounds = array<i64: 8, 128>}, {pipeline_mode = #tpu.pipeline_mode<synchronous>, transform_indices = @transform_3, window_bounds = array<i64: 128, 512>}, {pipeline_mode = #tpu.pipeline_mode<synchronous>, transform_indices = @transform_4, window_bounds = array<i64: 128, 512>}, {pipeline_mode = #tpu.pipeline_mode<synchronous>, transform_indices = @transform_5, window_bounds = array<i64: 1, 512>}, {pipeline_mode = #tpu.pipeline_mode<synchronous>, transform_indices = @transform_6, window_bounds = array<i64: 128, 128>}, {pipeline_mode = #tpu.pipeline_mode<synchronous>, transform_indices = @transform_7, window_bounds = array<i64: 1, 128>}, {pipeline_mode = #tpu.pipeline_mode<synchronous>, transform_indices = @transform_8, window_bounds = array<i64: 128, 128>}, {pipeline_mode = #tpu.pipeline_mode<synchronous>, transform_indices = @transform_9, window_bounds = array<i64: 1, 128>}, {transform_indices = @transform_10, window_bounds = array<i64: 64, 128>}, {pipeline_mode = #tpu.pipeline_mode<synchronous>, transform_indices = @transform_11, window_bounds = array<i64: 8, 128>}, {pipeline_mode = #tpu.pipeline_mode<synchronous>, transform_indices = @transform_12, window_bounds = array<i64: 8, 128>}]} {
    %c0_i32 = arith.constant 0 : i32
    %0 = arith.cmpi eq, %arg0, %c0_i32 : i32
    %1 = arith.extui %0 : i1 to i32
    %c0_i32_0 = arith.constant 0 : i32
    %2 = arith.cmpi ne, %1, %c0_i32_0 : i32
    scf.if %2 {
      %c0_76 = arith.constant 0 : index
      %c0_77 = arith.constant 0 : index
      %224 = vector.load %arg2[%c0_76, %c0_77] : memref<8x128xf32, #tpu.memory_space<vmem>>, vector<8x128xf32>
      %c0_78 = arith.constant 0 : index
      %c0_79 = arith.constant 0 : index
      %225 = vector.load %arg14[%c0_78, %c0_79] : memref<8x128xf32, #tpu.memory_space<vmem>>, vector<8x128xf32>
      tpu.vector_store %arg14[%c0_78, %c0_79], %224 {strides = array<i32>} : memref<8x128xf32, #tpu.memory_space<vmem>>, vector<8x128xf32>,
      %c0_80 = arith.constant 0 : index
      %c0_81 = arith.constant 0 : index
      %226 = vector.load %arg3[%c0_80, %c0_81] : memref<8x128xf32, #tpu.memory_space<vmem>>, vector<8x128xf32>
      %c0_82 = arith.constant 0 : index
      %c0_83 = arith.constant 0 : index
      %227 = vector.load %arg15[%c0_82, %c0_83] : memref<8x128xf32, #tpu.memory_space<vmem>>, vector<8x128xf32>
      tpu.vector_store %arg15[%c0_82, %c0_83], %226 {strides = array<i32>} : memref<8x128xf32, #tpu.memory_space<vmem>>, vector<8x128xf32>,
    } else {
    }
    %c0 = arith.constant 0 : index
    %c0_1 = arith.constant 0 : index
    %3 = vector.load %arg1[%c0, %c0_1] : memref<64x128xf32, #tpu.memory_space<vmem>>, vector<64x128xf32>
    %c0_2 = arith.constant 0 : index
    %c0_3 = arith.constant 0 : index
    %4 = vector.load %arg4[%c0_2, %c0_3] : memref<128x512xf32, #tpu.memory_space<vmem>>, vector<128x512xf32>
    %cst = arith.constant dense<0.000000e+00> : vector<64x512xf32>
    %5 = tpu.matmul %3, %4, %cst {dimension_numbers = #tpu.dot_dimension_numbers<[1], [0], [0], [1], [0, 0, 1, 1], [], []>} : vector<64x128xf32>, vector<128x512xf32>, vector<64x512xf32> -> vector<64x512xf32>
    %c0_4 = arith.constant 0 : index
    %c0_5 = arith.constant 0 : index
    %6 = vector.load %arg6[%c0_4, %c0_5] : memref<1x512xf32, #tpu.memory_space<vmem>>, vector<1x512xf32>
    %7 = vector.broadcast %6 : vector<1x512xf32> to vector<64x512xf32>
    %8 = arith.addf %5, %7 : vector<64x512xf32>
    %c0_6 = arith.constant 0 : index
    %c0_7 = arith.constant 0 : index
    %9 = vector.load %arg16[%c0_6, %c0_7] : memref<64x512xf32, #tpu.memory_space<vmem>>, vector<64x512xf32>
    tpu.vector_store %arg16[%c0_6, %c0_7], %8 {strides = array<i32>} : memref<64x512xf32, #tpu.memory_space<vmem>>, vector<64x512xf32>,
    %c0_8 = arith.constant 0 : index
    %c0_9 = arith.constant 0 : index
    %10 = vector.load %arg5[%c0_8, %c0_9] : memref<128x512xf32, #tpu.memory_space<vmem>>, vector<128x512xf32>
    %c0_10 = arith.constant 0 : index
    %c0_11 = arith.constant 0 : index
    %11 = vector.load %arg14[%c0_10, %c0_11] : memref<8x128xf32, #tpu.memory_space<vmem>>, vector<8x128xf32>
    %c0_12 = arith.constant 0 : index
    %c0_13 = arith.constant 0 : index
    %12 = vector.load %arg15[%c0_12, %c0_13] : memref<8x128xf32, #tpu.memory_space<vmem>>, vector<8x128xf32>
    %c0_i32_14 = arith.constant 0 : i32
    %c8_i32 = arith.constant 8 : i32
    %13 = arith.muli %c0_i32_14, %c8_i32 : i32
    %14 = tpu.assume_multiple %13, 8 : i32
    %15 = arith.index_cast %14 : i32 to index
    %c0_15 = arith.constant 0 : index
    %16 = vector.load %arg16[%15, %c0_15] : memref<64x512xf32, #tpu.memory_space<vmem>>, vector<8x512xf32>
    %cst_16 = arith.constant dense<0.000000e+00> : vector<8x512xf32>
    %17 = tpu.matmul %11, %10, %cst_16 {dimension_numbers = #tpu.dot_dimension_numbers<[1], [0], [0], [1], [0, 0, 1, 1], [], []>} : vector<8x128xf32>, vector<128x512xf32>, vector<8x512xf32> -> vector<8x512xf32>
    %18 = arith.addf %16, %17 : vector<8x512xf32>
    %19 = vector.extract_strided_slice %18 {offsets = [0, 0], sizes = [8, 384], strides = [1, 1]} : vector<8x512xf32> to vector<8x384xf32>
    %20 = arith.negf %19 : vector<8x384xf32>
    %21 = math.exp %20 : vector<8x384xf32>
    %cst_17 = arith.constant 1.000000e+00 : f32
    %22 = vector.broadcast %cst_17 : f32 to vector<8x384xf32>
    %23 = arith.addf %22, %21 : vector<8x384xf32>
    %24 = arith.divf %22, %23 : vector<8x384xf32>
    %25 = vector.extract_strided_slice %24 {offsets = [0, 0], sizes = [8, 128], strides = [1, 1]} : vector<8x384xf32> to vector<8x128xf32>
    %26 = vector.extract_strided_slice %24 {offsets = [0, 128], sizes = [8, 128], strides = [1, 1]} : vector<8x384xf32> to vector<8x128xf32>
    %27 = vector.extract_strided_slice %24 {offsets = [0, 256], sizes = [8, 128], strides = [1, 1]} : vector<8x384xf32> to vector<8x128xf32>
    %28 = vector.extract_strided_slice %18 {offsets = [0, 384], sizes = [8, 128], strides = [1, 1]} : vector<8x512xf32> to vector<8x128xf32>
    %29 = math.tanh %28 : vector<8x128xf32>
    %30 = arith.mulf %26, %12 : vector<8x128xf32>
    %31 = arith.mulf %25, %29 : vector<8x128xf32>
    %32 = arith.addf %30, %31 : vector<8x128xf32>
    %33 = math.tanh %32 : vector<8x128xf32>
    %34 = arith.mulf %27, %33 : vector<8x128xf32>
    %35 = arith.index_cast %14 : i32 to index
    %c0_18 = arith.constant 0 : index
    %36 = vector.load %arg17[%35, %c0_18] : memref<64x128xf32, #tpu.memory_space<vmem>>, vector<8x128xf32>
    tpu.vector_store %arg17[%35, %c0_18], %34 {strides = array<i32>} : memref<64x128xf32, #tpu.memory_space<vmem>>, vector<8x128xf32>,
    %c1_i32 = arith.constant 1 : i32
    %c8_i32_19 = arith.constant 8 : i32
    %37 = arith.muli %c1_i32, %c8_i32_19 : i32
    %38 = tpu.assume_multiple %37, 8 : i32
    %39 = arith.index_cast %38 : i32 to index
    %c0_20 = arith.constant 0 : index
    %40 = vector.load %arg16[%39, %c0_20] : memref<64x512xf32, #tpu.memory_space<vmem>>, vector<8x512xf32>
    %cst_21 = arith.constant dense<0.000000e+00> : vector<8x512xf32>
    %41 = tpu.matmul %34, %10, %cst_21 {dimension_numbers = #tpu.dot_dimension_numbers<[1], [0], [0], [1], [0, 0, 1, 1], [], []>} : vector<8x128xf32>, vector<128x512xf32>, vector<8x512xf32> -> vector<8x512xf32>
    %42 = arith.addf %40, %41 : vector<8x512xf32>
    %43 = vector.extract_strided_slice %42 {offsets = [0, 0], sizes = [8, 384], strides = [1, 1]} : vector<8x512xf32> to vector<8x384xf32>
    %44 = arith.negf %43 : vector<8x384xf32>
    %45 = math.exp %44 : vector<8x384xf32>
    %cst_22 = arith.constant 1.000000e+00 : f32
    %46 = vector.broadcast %cst_22 : f32 to vector<8x384xf32>
    %47 = arith.addf %46, %45 : vector<8x384xf32>
    %48 = arith.divf %46, %47 : vector<8x384xf32>
    %49 = vector.extract_strided_slice %48 {offsets = [0, 0], sizes = [8, 128], strides = [1, 1]} : vector<8x384xf32> to vector<8x128xf32>
    %50 = vector.extract_strided_slice %48 {offsets = [0, 128], sizes = [8, 128], strides = [1, 1]} : vector<8x384xf32> to vector<8x128xf32>
    %51 = vector.extract_strided_slice %48 {offsets = [0, 256], sizes = [8, 128], strides = [1, 1]} : vector<8x384xf32> to vector<8x128xf32>
    %52 = vector.extract_strided_slice %42 {offsets = [0, 384], sizes = [8, 128], strides = [1, 1]} : vector<8x512xf32> to vector<8x128xf32>
    %53 = math.tanh %52 : vector<8x128xf32>
    %54 = arith.mulf %50, %32 : vector<8x128xf32>
    %55 = arith.mulf %49, %53 : vector<8x128xf32>
    %56 = arith.addf %54, %55 : vector<8x128xf32>
    %57 = math.tanh %56 : vector<8x128xf32>
    %58 = arith.mulf %51, %57 : vector<8x128xf32>
    %59 = arith.index_cast %38 : i32 to index
    %c0_23 = arith.constant 0 : index
    %60 = vector.load %arg17[%59, %c0_23] : memref<64x128xf32, #tpu.memory_space<vmem>>, vector<8x128xf32>
    tpu.vector_store %arg17[%59, %c0_23], %58 {strides = array<i32>} : memref<64x128xf32, #tpu.memory_space<vmem>>, vector<8x128xf32>,
    %c2_i32 = arith.constant 2 : i32
    %c8_i32_24 = arith.constant 8 : i32
    %61 = arith.muli %c2_i32, %c8_i32_24 : i32
    %62 = tpu.assume_multiple %61, 8 : i32
    %63 = arith.index_cast %62 : i32 to index
    %c0_25 = arith.constant 0 : index
    %64 = vector.load %arg16[%63, %c0_25] : memref<64x512xf32, #tpu.memory_space<vmem>>, vector<8x512xf32>
    %cst_26 = arith.constant dense<0.000000e+00> : vector<8x512xf32>
    %65 = tpu.matmul %58, %10, %cst_26 {dimension_numbers = #tpu.dot_dimension_numbers<[1], [0], [0], [1], [0, 0, 1, 1], [], []>} : vector<8x128xf32>, vector<128x512xf32>, vector<8x512xf32> -> vector<8x512xf32>
    %66 = arith.addf %64, %65 : vector<8x512xf32>
    %67 = vector.extract_strided_slice %66 {offsets = [0, 0], sizes = [8, 384], strides = [1, 1]} : vector<8x512xf32> to vector<8x384xf32>
    %68 = arith.negf %67 : vector<8x384xf32>
    %69 = math.exp %68 : vector<8x384xf32>
    %cst_27 = arith.constant 1.000000e+00 : f32
    %70 = vector.broadcast %cst_27 : f32 to vector<8x384xf32>
    %71 = arith.addf %70, %69 : vector<8x384xf32>
    %72 = arith.divf %70, %71 : vector<8x384xf32>
    %73 = vector.extract_strided_slice %72 {offsets = [0, 0], sizes = [8, 128], strides = [1, 1]} : vector<8x384xf32> to vector<8x128xf32>
    %74 = vector.extract_strided_slice %72 {offsets = [0, 128], sizes = [8, 128], strides = [1, 1]} : vector<8x384xf32> to vector<8x128xf32>
    %75 = vector.extract_strided_slice %72 {offsets = [0, 256], sizes = [8, 128], strides = [1, 1]} : vector<8x384xf32> to vector<8x128xf32>
    %76 = vector.extract_strided_slice %66 {offsets = [0, 384], sizes = [8, 128], strides = [1, 1]} : vector<8x512xf32> to vector<8x128xf32>
    %77 = math.tanh %76 : vector<8x128xf32>
    %78 = arith.mulf %74, %56 : vector<8x128xf32>
    %79 = arith.mulf %73, %77 : vector<8x128xf32>
    %80 = arith.addf %78, %79 : vector<8x128xf32>
    %81 = math.tanh %80 : vector<8x128xf32>
    %82 = arith.mulf %75, %81 : vector<8x128xf32>
    %83 = arith.index_cast %62 : i32 to index
    %c0_28 = arith.constant 0 : index
    %84 = vector.load %arg17[%83, %c0_28] : memref<64x128xf32, #tpu.memory_space<vmem>>, vector<8x128xf32>
    tpu.vector_store %arg17[%83, %c0_28], %82 {strides = array<i32>} : memref<64x128xf32, #tpu.memory_space<vmem>>, vector<8x128xf32>,
    %c3_i32 = arith.constant 3 : i32
    %c8_i32_29 = arith.constant 8 : i32
    %85 = arith.muli %c3_i32, %c8_i32_29 : i32
    %86 = tpu.assume_multiple %85, 8 : i32
    %87 = arith.index_cast %86 : i32 to index
    %c0_30 = arith.constant 0 : index
    %88 = vector.load %arg16[%87, %c0_30] : memref<64x512xf32, #tpu.memory_space<vmem>>, vector<8x512xf32>
    %cst_31 = arith.constant dense<0.000000e+00> : vector<8x512xf32>
    %89 = tpu.matmul %82, %10, %cst_31 {dimension_numbers = #tpu.dot_dimension_numbers<[1], [0], [0], [1], [0, 0, 1, 1], [], []>} : vector<8x128xf32>, vector<128x512xf32>, vector<8x512xf32> -> vector<8x512xf32>
    %90 = arith.addf %88, %89 : vector<8x512xf32>
    %91 = vector.extract_strided_slice %90 {offsets = [0, 0], sizes = [8, 384], strides = [1, 1]} : vector<8x512xf32> to vector<8x384xf32>
    %92 = arith.negf %91 : vector<8x384xf32>
    %93 = math.exp %92 : vector<8x384xf32>
    %cst_32 = arith.constant 1.000000e+00 : f32
    %94 = vector.broadcast %cst_32 : f32 to vector<8x384xf32>
    %95 = arith.addf %94, %93 : vector<8x384xf32>
    %96 = arith.divf %94, %95 : vector<8x384xf32>
    %97 = vector.extract_strided_slice %96 {offsets = [0, 0], sizes = [8, 128], strides = [1, 1]} : vector<8x384xf32> to vector<8x128xf32>
    %98 = vector.extract_strided_slice %96 {offsets = [0, 128], sizes = [8, 128], strides = [1, 1]} : vector<8x384xf32> to vector<8x128xf32>
    %99 = vector.extract_strided_slice %96 {offsets = [0, 256], sizes = [8, 128], strides = [1, 1]} : vector<8x384xf32> to vector<8x128xf32>
    %100 = vector.extract_strided_slice %90 {offsets = [0, 384], sizes = [8, 128], strides = [1, 1]} : vector<8x512xf32> to vector<8x128xf32>
    %101 = math.tanh %100 : vector<8x128xf32>
    %102 = arith.mulf %98, %80 : vector<8x128xf32>
    %103 = arith.mulf %97, %101 : vector<8x128xf32>
    %104 = arith.addf %102, %103 : vector<8x128xf32>
    %105 = math.tanh %104 : vector<8x128xf32>
    %106 = arith.mulf %99, %105 : vector<8x128xf32>
    %107 = arith.index_cast %86 : i32 to index
    %c0_33 = arith.constant 0 : index
    %108 = vector.load %arg17[%107, %c0_33] : memref<64x128xf32, #tpu.memory_space<vmem>>, vector<8x128xf32>
    tpu.vector_store %arg17[%107, %c0_33], %106 {strides = array<i32>} : memref<64x128xf32, #tpu.memory_space<vmem>>, vector<8x128xf32>,
    %c4_i32 = arith.constant 4 : i32
    %c8_i32_34 = arith.constant 8 : i32
    %109 = arith.muli %c4_i32, %c8_i32_34 : i32
    %110 = tpu.assume_multiple %109, 8 : i32
    %111 = arith.index_cast %110 : i32 to index
    %c0_35 = arith.constant 0 : index
    %112 = vector.load %arg16[%111, %c0_35] : memref<64x512xf32, #tpu.memory_space<vmem>>, vector<8x512xf32>
    %cst_36 = arith.constant dense<0.000000e+00> : vector<8x512xf32>
    %113 = tpu.matmul %106, %10, %cst_36 {dimension_numbers = #tpu.dot_dimension_numbers<[1], [0], [0], [1], [0, 0, 1, 1], [], []>} : vector<8x128xf32>, vector<128x512xf32>, vector<8x512xf32> -> vector<8x512xf32>
    %114 = arith.addf %112, %113 : vector<8x512xf32>
    %115 = vector.extract_strided_slice %114 {offsets = [0, 0], sizes = [8, 384], strides = [1, 1]} : vector<8x512xf32> to vector<8x384xf32>
    %116 = arith.negf %115 : vector<8x384xf32>
    %117 = math.exp %116 : vector<8x384xf32>
    %cst_37 = arith.constant 1.000000e+00 : f32
    %118 = vector.broadcast %cst_37 : f32 to vector<8x384xf32>
    %119 = arith.addf %118, %117 : vector<8x384xf32>
    %120 = arith.divf %118, %119 : vector<8x384xf32>
    %121 = vector.extract_strided_slice %120 {offsets = [0, 0], sizes = [8, 128], strides = [1, 1]} : vector<8x384xf32> to vector<8x128xf32>
    %122 = vector.extract_strided_slice %120 {offsets = [0, 128], sizes = [8, 128], strides = [1, 1]} : vector<8x384xf32> to vector<8x128xf32>
    %123 = vector.extract_strided_slice %120 {offsets = [0, 256], sizes = [8, 128], strides = [1, 1]} : vector<8x384xf32> to vector<8x128xf32>
    %124 = vector.extract_strided_slice %114 {offsets = [0, 384], sizes = [8, 128], strides = [1, 1]} : vector<8x512xf32> to vector<8x128xf32>
    %125 = math.tanh %124 : vector<8x128xf32>
    %126 = arith.mulf %122, %104 : vector<8x128xf32>
    %127 = arith.mulf %121, %125 : vector<8x128xf32>
    %128 = arith.addf %126, %127 : vector<8x128xf32>
    %129 = math.tanh %128 : vector<8x128xf32>
    %130 = arith.mulf %123, %129 : vector<8x128xf32>
    %131 = arith.index_cast %110 : i32 to index
    %c0_38 = arith.constant 0 : index
    %132 = vector.load %arg17[%131, %c0_38] : memref<64x128xf32, #tpu.memory_space<vmem>>, vector<8x128xf32>
    tpu.vector_store %arg17[%131, %c0_38], %130 {strides = array<i32>} : memref<64x128xf32, #tpu.memory_space<vmem>>, vector<8x128xf32>,
    %c5_i32 = arith.constant 5 : i32
    %c8_i32_39 = arith.constant 8 : i32
    %133 = arith.muli %c5_i32, %c8_i32_39 : i32
    %134 = tpu.assume_multiple %133, 8 : i32
    %135 = arith.index_cast %134 : i32 to index
    %c0_40 = arith.constant 0 : index
    %136 = vector.load %arg16[%135, %c0_40] : memref<64x512xf32, #tpu.memory_space<vmem>>, vector<8x512xf32>
    %cst_41 = arith.constant dense<0.000000e+00> : vector<8x512xf32>
    %137 = tpu.matmul %130, %10, %cst_41 {dimension_numbers = #tpu.dot_dimension_numbers<[1], [0], [0], [1], [0, 0, 1, 1], [], []>} : vector<8x128xf32>, vector<128x512xf32>, vector<8x512xf32> -> vector<8x512xf32>
    %138 = arith.addf %136, %137 : vector<8x512xf32>
    %139 = vector.extract_strided_slice %138 {offsets = [0, 0], sizes = [8, 384], strides = [1, 1]} : vector<8x512xf32> to vector<8x384xf32>
    %140 = arith.negf %139 : vector<8x384xf32>
    %141 = math.exp %140 : vector<8x384xf32>
    %cst_42 = arith.constant 1.000000e+00 : f32
    %142 = vector.broadcast %cst_42 : f32 to vector<8x384xf32>
    %143 = arith.addf %142, %141 : vector<8x384xf32>
    %144 = arith.divf %142, %143 : vector<8x384xf32>
    %145 = vector.extract_strided_slice %144 {offsets = [0, 0], sizes = [8, 128], strides = [1, 1]} : vector<8x384xf32> to vector<8x128xf32>
    %146 = vector.extract_strided_slice %144 {offsets = [0, 128], sizes = [8, 128], strides = [1, 1]} : vector<8x384xf32> to vector<8x128xf32>
    %147 = vector.extract_strided_slice %144 {offsets = [0, 256], sizes = [8, 128], strides = [1, 1]} : vector<8x384xf32> to vector<8x128xf32>
    %148 = vector.extract_strided_slice %138 {offsets = [0, 384], sizes = [8, 128], strides = [1, 1]} : vector<8x512xf32> to vector<8x128xf32>
    %149 = math.tanh %148 : vector<8x128xf32>
    %150 = arith.mulf %146, %128 : vector<8x128xf32>
    %151 = arith.mulf %145, %149 : vector<8x128xf32>
    %152 = arith.addf %150, %151 : vector<8x128xf32>
    %153 = math.tanh %152 : vector<8x128xf32>
    %154 = arith.mulf %147, %153 : vector<8x128xf32>
    %155 = arith.index_cast %134 : i32 to index
    %c0_43 = arith.constant 0 : index
    %156 = vector.load %arg17[%155, %c0_43] : memref<64x128xf32, #tpu.memory_space<vmem>>, vector<8x128xf32>
    tpu.vector_store %arg17[%155, %c0_43], %154 {strides = array<i32>} : memref<64x128xf32, #tpu.memory_space<vmem>>, vector<8x128xf32>,
    %c6_i32 = arith.constant 6 : i32
    %c8_i32_44 = arith.constant 8 : i32
    %157 = arith.muli %c6_i32, %c8_i32_44 : i32
    %158 = tpu.assume_multiple %157, 8 : i32
    %159 = arith.index_cast %158 : i32 to index
    %c0_45 = arith.constant 0 : index
    %160 = vector.load %arg16[%159, %c0_45] : memref<64x512xf32, #tpu.memory_space<vmem>>, vector<8x512xf32>
    %cst_46 = arith.constant dense<0.000000e+00> : vector<8x512xf32>
    %161 = tpu.matmul %154, %10, %cst_46 {dimension_numbers = #tpu.dot_dimension_numbers<[1], [0], [0], [1], [0, 0, 1, 1], [], []>} : vector<8x128xf32>, vector<128x512xf32>, vector<8x512xf32> -> vector<8x512xf32>
    %162 = arith.addf %160, %161 : vector<8x512xf32>
    %163 = vector.extract_strided_slice %162 {offsets = [0, 0], sizes = [8, 384], strides = [1, 1]} : vector<8x512xf32> to vector<8x384xf32>
    %164 = arith.negf %163 : vector<8x384xf32>
    %165 = math.exp %164 : vector<8x384xf32>
    %cst_47 = arith.constant 1.000000e+00 : f32
    %166 = vector.broadcast %cst_47 : f32 to vector<8x384xf32>
    %167 = arith.addf %166, %165 : vector<8x384xf32>
    %168 = arith.divf %166, %167 : vector<8x384xf32>
    %169 = vector.extract_strided_slice %168 {offsets = [0, 0], sizes = [8, 128], strides = [1, 1]} : vector<8x384xf32> to vector<8x128xf32>
    %170 = vector.extract_strided_slice %168 {offsets = [0, 128], sizes = [8, 128], strides = [1, 1]} : vector<8x384xf32> to vector<8x128xf32>
    %171 = vector.extract_strided_slice %168 {offsets = [0, 256], sizes = [8, 128], strides = [1, 1]} : vector<8x384xf32> to vector<8x128xf32>
    %172 = vector.extract_strided_slice %162 {offsets = [0, 384], sizes = [8, 128], strides = [1, 1]} : vector<8x512xf32> to vector<8x128xf32>
    %173 = math.tanh %172 : vector<8x128xf32>
    %174 = arith.mulf %170, %152 : vector<8x128xf32>
    %175 = arith.mulf %169, %173 : vector<8x128xf32>
    %176 = arith.addf %174, %175 : vector<8x128xf32>
    %177 = math.tanh %176 : vector<8x128xf32>
    %178 = arith.mulf %171, %177 : vector<8x128xf32>
    %179 = arith.index_cast %158 : i32 to index
    %c0_48 = arith.constant 0 : index
    %180 = vector.load %arg17[%179, %c0_48] : memref<64x128xf32, #tpu.memory_space<vmem>>, vector<8x128xf32>
    tpu.vector_store %arg17[%179, %c0_48], %178 {strides = array<i32>} : memref<64x128xf32, #tpu.memory_space<vmem>>, vector<8x128xf32>,
    %c7_i32 = arith.constant 7 : i32
    %c8_i32_49 = arith.constant 8 : i32
    %181 = arith.muli %c7_i32, %c8_i32_49 : i32
    %182 = tpu.assume_multiple %181, 8 : i32
    %183 = arith.index_cast %182 : i32 to index
    %c0_50 = arith.constant 0 : index
    %184 = vector.load %arg16[%183, %c0_50] : memref<64x512xf32, #tpu.memory_space<vmem>>, vector<8x512xf32>
    %cst_51 = arith.constant dense<0.000000e+00> : vector<8x512xf32>
    %185 = tpu.matmul %178, %10, %cst_51 {dimension_numbers = #tpu.dot_dimension_numbers<[1], [0], [0], [1], [0, 0, 1, 1], [], []>} : vector<8x128xf32>, vector<128x512xf32>, vector<8x512xf32> -> vector<8x512xf32>
    %186 = arith.addf %184, %185 : vector<8x512xf32>
    %187 = vector.extract_strided_slice %186 {offsets = [0, 0], sizes = [8, 384], strides = [1, 1]} : vector<8x512xf32> to vector<8x384xf32>
    %188 = arith.negf %187 : vector<8x384xf32>
    %189 = math.exp %188 : vector<8x384xf32>
    %cst_52 = arith.constant 1.000000e+00 : f32
    %190 = vector.broadcast %cst_52 : f32 to vector<8x384xf32>
    %191 = arith.addf %190, %189 : vector<8x384xf32>
    %192 = arith.divf %190, %191 : vector<8x384xf32>
    %193 = vector.extract_strided_slice %192 {offsets = [0, 0], sizes = [8, 128], strides = [1, 1]} : vector<8x384xf32> to vector<8x128xf32>
    %194 = vector.extract_strided_slice %192 {offsets = [0, 128], sizes = [8, 128], strides = [1, 1]} : vector<8x384xf32> to vector<8x128xf32>
    %195 = vector.extract_strided_slice %192 {offsets = [0, 256], sizes = [8, 128], strides = [1, 1]} : vector<8x384xf32> to vector<8x128xf32>
    %196 = vector.extract_strided_slice %186 {offsets = [0, 384], sizes = [8, 128], strides = [1, 1]} : vector<8x512xf32> to vector<8x128xf32>
    %197 = math.tanh %196 : vector<8x128xf32>
    %198 = arith.mulf %194, %176 : vector<8x128xf32>
    %199 = arith.mulf %193, %197 : vector<8x128xf32>
    %200 = arith.addf %198, %199 : vector<8x128xf32>
    %201 = math.tanh %200 : vector<8x128xf32>
    %202 = arith.mulf %195, %201 : vector<8x128xf32>
    %203 = arith.index_cast %182 : i32 to index
    %c0_53 = arith.constant 0 : index
    %204 = vector.load %arg17[%203, %c0_53] : memref<64x128xf32, #tpu.memory_space<vmem>>, vector<8x128xf32>
    tpu.vector_store %arg17[%203, %c0_53], %202 {strides = array<i32>} : memref<64x128xf32, #tpu.memory_space<vmem>>, vector<8x128xf32>,
    %c8_i32_54 = arith.constant 8 : i32
    %c0_55 = arith.constant 0 : index
    %c0_56 = arith.constant 0 : index
    %205 = vector.load %arg14[%c0_55, %c0_56] : memref<8x128xf32, #tpu.memory_space<vmem>>, vector<8x128xf32>
    tpu.vector_store %arg14[%c0_55, %c0_56], %202 {strides = array<i32>} : memref<8x128xf32, #tpu.memory_space<vmem>>, vector<8x128xf32>,
    %c0_57 = arith.constant 0 : index
    %c0_58 = arith.constant 0 : index
    %206 = vector.load %arg15[%c0_57, %c0_58] : memref<8x128xf32, #tpu.memory_space<vmem>>, vector<8x128xf32>
    tpu.vector_store %arg15[%c0_57, %c0_58], %200 {strides = array<i32>} : memref<8x128xf32, #tpu.memory_space<vmem>>, vector<8x128xf32>,
    %c0_59 = arith.constant 0 : index
    %c0_60 = arith.constant 0 : index
    %207 = vector.load %arg17[%c0_59, %c0_60] : memref<64x128xf32, #tpu.memory_space<vmem>>, vector<64x128xf32>
    %c0_61 = arith.constant 0 : index
    %c0_62 = arith.constant 0 : index
    %208 = vector.load %arg7[%c0_61, %c0_62] : memref<128x128xf32, #tpu.memory_space<vmem>>, vector<128x128xf32>
    %cst_63 = arith.constant dense<0.000000e+00> : vector<64x128xf32>
    %209 = tpu.matmul %207, %208, %cst_63 {dimension_numbers = #tpu.dot_dimension_numbers<[1], [0], [0], [1], [0, 0, 1, 1], [], []>} : vector<64x128xf32>, vector<128x128xf32>, vector<64x128xf32> -> vector<64x128xf32>
    %c0_64 = arith.constant 0 : index
    %c0_65 = arith.constant 0 : index
    %210 = vector.load %arg8[%c0_64, %c0_65] : memref<1x128xf32, #tpu.memory_space<vmem>>, vector<1x128xf32>
    %211 = vector.broadcast %210 : vector<1x128xf32> to vector<64x128xf32>
    %212 = arith.addf %209, %211 : vector<64x128xf32>
    %cst_66 = arith.constant 0.000000e+00 : f32
    %213 = vector.broadcast %cst_66 : f32 to vector<64x128xf32>
    %214 = arith.maximumf %212, %213 : vector<64x128xf32>
    %c0_67 = arith.constant 0 : index
    %c0_68 = arith.constant 0 : index
    %215 = vector.load %arg9[%c0_67, %c0_68] : memref<128x128xf32, #tpu.memory_space<vmem>>, vector<128x128xf32>
    %cst_69 = arith.constant dense<0.000000e+00> : vector<64x128xf32>
    %216 = tpu.matmul %214, %215, %cst_69 {dimension_numbers = #tpu.dot_dimension_numbers<[1], [0], [0], [1], [0, 0, 1, 1], [], []>} : vector<64x128xf32>, vector<128x128xf32>, vector<64x128xf32> -> vector<64x128xf32>
    %c0_70 = arith.constant 0 : index
    %c0_71 = arith.constant 0 : index
    %217 = vector.load %arg10[%c0_70, %c0_71] : memref<1x128xf32, #tpu.memory_space<vmem>>, vector<1x128xf32>
    %218 = vector.broadcast %217 : vector<1x128xf32> to vector<64x128xf32>
    %219 = arith.addf %216, %218 : vector<64x128xf32>
    %c0_72 = arith.constant 0 : index
    %c0_73 = arith.constant 0 : index
    %220 = vector.load %arg11[%c0_72, %c0_73] : memref<64x128xf32, #tpu.memory_space<vmem>>, vector<64x128xf32>
    tpu.vector_store %arg11[%c0_72, %c0_73], %219 {strides = array<i32>} : memref<64x128xf32, #tpu.memory_space<vmem>>, vector<64x128xf32>,
    %c0_i32_74 = arith.constant 0 : i32
    %221 = arith.cmpi eq, %arg0, %c0_i32_74 : i32
    %222 = arith.extui %221 : i1 to i32
    %c0_i32_75 = arith.constant 0 : i32
    %223 = arith.cmpi ne, %222, %c0_i32_75 : i32
    scf.if %223 {
      %c0_76 = arith.constant 0 : index
      %c0_77 = arith.constant 0 : index
      %224 = vector.load %arg12[%c0_76, %c0_77] : memref<8x128xf32, #tpu.memory_space<vmem>>, vector<8x128xf32>
      tpu.vector_store %arg12[%c0_76, %c0_77], %202 {strides = array<i32>} : memref<8x128xf32, #tpu.memory_space<vmem>>, vector<8x128xf32>,
      %c0_78 = arith.constant 0 : index
      %c0_79 = arith.constant 0 : index
      %225 = vector.load %arg13[%c0_78, %c0_79] : memref<8x128xf32, #tpu.memory_space<vmem>>, vector<8x128xf32>
      tpu.vector_store %arg13[%c0_78, %c0_79], %200 {strides = array<i32>} : memref<8x128xf32, #tpu.memory_space<vmem>>, vector<8x128xf32>,
    } else {
    }
    return
  }
  func.func @transform_0(%arg0: i32) -> (i32, i32) {
    %c0_i32 = arith.constant 0 : i32
    %c0_i32_0 = arith.constant 0 : i32
    return %arg0, %c0_i32 : i32, i32
  }
  func.func @transform_1(%arg0: i32) -> (i32, i32) {
    %c0_i32 = arith.constant 0 : i32
    %c0_i32_0 = arith.constant 0 : i32
    %c0_i32_1 = arith.constant 0 : i32
    return %c0_i32, %c0_i32_0 : i32, i32
  }
  func.func @transform_2(%arg0: i32) -> (i32, i32) {
    %c0_i32 = arith.constant 0 : i32
    %c0_i32_0 = arith.constant 0 : i32
    %c0_i32_1 = arith.constant 0 : i32
    return %c0_i32, %c0_i32_0 : i32, i32
  }
  func.func @transform_3(%arg0: i32) -> (i32, i32) {
    %c0_i32 = arith.constant 0 : i32
    %c0_i32_0 = arith.constant 0 : i32
    %c0_i32_1 = arith.constant 0 : i32
    return %c0_i32, %c0_i32_0 : i32, i32
  }
  func.func @transform_4(%arg0: i32) -> (i32, i32) {
    %c0_i32 = arith.constant 0 : i32
    %c0_i32_0 = arith.constant 0 : i32
    %c0_i32_1 = arith.constant 0 : i32
    return %c0_i32, %c0_i32_0 : i32, i32
  }
  func.func @transform_5(%arg0: i32) -> (i32, i32) {
    %c0_i32 = arith.constant 0 : i32
    %c0_i32_0 = arith.constant 0 : i32
    %c0_i32_1 = arith.constant 0 : i32
    return %c0_i32, %c0_i32_0 : i32, i32
  }
  func.func @transform_6(%arg0: i32) -> (i32, i32) {
    %c0_i32 = arith.constant 0 : i32
    %c0_i32_0 = arith.constant 0 : i32
    %c0_i32_1 = arith.constant 0 : i32
    return %c0_i32, %c0_i32_0 : i32, i32
  }
  func.func @transform_7(%arg0: i32) -> (i32, i32) {
    %c0_i32 = arith.constant 0 : i32
    %c0_i32_0 = arith.constant 0 : i32
    %c0_i32_1 = arith.constant 0 : i32
    return %c0_i32, %c0_i32_0 : i32, i32
  }
  func.func @transform_8(%arg0: i32) -> (i32, i32) {
    %c0_i32 = arith.constant 0 : i32
    %c0_i32_0 = arith.constant 0 : i32
    %c0_i32_1 = arith.constant 0 : i32
    return %c0_i32, %c0_i32_0 : i32, i32
  }
  func.func @transform_9(%arg0: i32) -> (i32, i32) {
    %c0_i32 = arith.constant 0 : i32
    %c0_i32_0 = arith.constant 0 : i32
    %c0_i32_1 = arith.constant 0 : i32
    return %c0_i32, %c0_i32_0 : i32, i32
  }
  func.func @transform_10(%arg0: i32) -> (i32, i32) {
    %c0_i32 = arith.constant 0 : i32
    %c0_i32_0 = arith.constant 0 : i32
    return %arg0, %c0_i32 : i32, i32
  }
  func.func @transform_11(%arg0: i32) -> (i32, i32) {
    %c0_i32 = arith.constant 0 : i32
    %c0_i32_0 = arith.constant 0 : i32
    %c0_i32_1 = arith.constant 0 : i32
    return %c0_i32, %c0_i32_0 : i32, i32
  }
  func.func @transform_12(%arg0: i32) -> (i32, i32) {
    %c0_i32 = arith.constant 0 : i32
    %c0_i32_0 = arith.constant 0 : i32
    %c0_i32_1 = arith.constant 0 : i32
    return %c0_i32, %c0_i32_0 : i32, i32
  }
}

</mosaic_0001>

<llo_original>
// kernel: tpu_custom_call.1
$region0: #{tpu_custom_call.1}
  #allocation0 [shape = 'u32[]', space=smem, size = 0x4, offset = 0x4, fixed_abs, tag = 'smem constant byte address 0x4 - core index']
  #allocation1 [shape = 'u32[144,128]{1,0:T(1,128)}', space=vmem, size = 0x12000, scoped, tag = 'internal scratch']
  #allocation2 [shape = 'f32[8,128]{1,0:T(8,128)}', space=vmem, size = 0x1000, scoped, tag = 'scratch operand']
  #allocation3 [shape = 'f32[8,128]{1,0:T(8,128)}', space=vmem, size = 0x1000, scoped, tag = 'scratch operand']
  #allocation4 [shape = 'f32[64,512]{1,0:T(8,128)}', space=vmem, size = 0x20000, scoped, tag = 'scratch operand']
  #allocation5 [shape = 'f32[64,128]{1,0:T(8,128)}', space=vmem, size = 0x8000, scoped, tag = 'scratch operand']
  %s0 = inlined_call_operand.hbm [shape: f32[64,128], index: 0, kind: input, shape index: {}]
  %s1 = inlined_call_operand.hbm [shape: f32[8,128], index: 1, kind: input, shape index: {}]
  %s2 = inlined_call_operand.hbm [shape: f32[8,128], index: 2, kind: input, shape index: {}]
  %s3 = inlined_call_operand.hbm [shape: f32[128,512], index: 3, kind: input, shape index: {}]
  %s4 = inlined_call_operand.hbm [shape: f32[128,512], index: 4, kind: input, shape index: {}]
  %s5 = inlined_call_operand.vmem [shape: f32[1,512], index: 5, kind: input, shape index: {}]
  %s6 = inlined_call_operand.hbm [shape: f32[128,128], index: 6, kind: input, shape index: {}]
  %s7 = inlined_call_operand.vmem [shape: f32[1,128], index: 7, kind: input, shape index: {}]
  %s8 = inlined_call_operand.hbm [shape: f32[128,128], index: 8, kind: input, shape index: {}]
  %s9 = inlined_call_operand.vmem [shape: f32[1,128], index: 9, kind: input, shape index: {}]
  %s10 = inlined_call_operand.hbm [shape: f32[64,128], index: 10, kind: output, shape index: {0}]
  %s11 = inlined_call_operand.hbm [shape: f32[8,128], index: 11, kind: output, shape index: {1}]
  %s12 = inlined_call_operand.hbm [shape: f32[8,128], index: 12, kind: output, shape index: {2}]
  %13 = xla_tuple %s10, %s11, %s12
  %s14 = sld [smem:[#allocation0]]
  $region102: #{tpu_custom_call.1} parent=0
    _
  %s16 = ssub.s32 1, %s14
  %s17 = scalar_select 0, %s16, %s14
  $region1: #{tpu_custom_call.1} parent=0
    #allocation6 [shape = 'u8[32768]{0}', space=vmem, size = 0x8000, scoped, tag = 'input window, operand 0, single buffered']
    #allocation7 [shape = 's32[1]{0}', space=sflag, size = 0x4, scoped, tag = 'scoped memory for tpu_custom_call.1']
    #allocation8 [shape = 's32[1]{0}', space=sflag, size = 0x4, scoped, tag = 'scoped memory for tpu_custom_call.1']
    #allocation9 [shape = 'u8[4096]{0}', space=vmem, size = 0x1000, scoped, tag = 'input window, operand 1, single buffered']
    #allocation10 [shape = 's32[1]{0}', space=sflag, size = 0x4, scoped, tag = 'scoped memory for tpu_custom_call.1']
    #allocation11 [shape = 'u8[4096]{0}', space=vmem, size = 0x1000, scoped, tag = 'input window, operand 2, single buffered']
    #allocation12 [shape = 'u8[262144]{0}', space=vmem, size = 0x40000, scoped, tag = 'input window, operand 3, single buffered']
    #allocation13 [shape = 's32[1]{0}', space=sflag, size = 0x4, scoped, tag = 'scoped memory for tpu_custom_call.1']
    #allocation14 [shape = 'u8[262144]{0}', space=vmem, size = 0x40000, scoped, tag = 'input window, operand 4, single buffered']
    #allocation15 [shape = 'u8[65536]{0}', space=vmem, size = 0x10000, scoped, tag = 'input window, operand 6, single buffered']
    #allocation16 [shape = 's32[1]{0}', space=sflag, size = 0x4, scoped, tag = 'scoped memory for tpu_custom_call.1']
    #allocation17 [shape = 'u8[65536]{0}', space=vmem, size = 0x10000, scoped, tag = 'input window, operand 8, single buffered']
    #allocation18 [shape = 'u8[32768]{0}', space=vmem, size = 0x8000, scoped, tag = 'output window, operand 0, single buffered']
    #allocation19 [shape = 'u8[4096]{0}', space=vmem, size = 0x1000, scoped, tag = 'output window, operand 1, single buffered']
    #allocation20 [shape = 's32[1]{0}', space=sflag, size = 0x4, scoped, tag = 'scoped memory for tpu_custom_call.1']
    #allocation21 [shape = 'u8[4096]{0}', space=vmem, size = 0x1000, scoped, tag = 'output window, operand 2, single buffered']
    %18 = vsyncpa [#allocation7], 0
    %19 = vsyncpa [#allocation10], 0
    %20 = vsyncpa [#allocation13], 0
    %21 = vsyncpa [#allocation16], 0
    %22 = vsyncpa [#allocation8], 0
    %23 = vsyncpa [#allocation20], 0
    // Predicated region
    $region2: #{tpu_custom_call.1} parent=1 // pred_check
      _
    $region3: #{tpu_custom_call.1} parent=1 // pred_check_branch
      %25 = sbr.rel (0) target = $region5
    $region4: #{tpu_custom_call.1} parent=1 // pred_region
      %s27 = ssub.s32 1024, 1024
      %28 = vsyncadd [#allocation7], %s27
      %s29 = sshll.u32 [#allocation6], 4
      %s30 = int_to_ptr.vmem [resolvable:$true] %s29
      %35 = dma.hbm_to_vmem [thread:$0]  %s0, 1024, %s30, [#allocation7], 128, 128, 8
    $region5: #{tpu_custom_call.1} parent=1 // pred_fallthru
      _
    // Predicated region
    $region6: #{tpu_custom_call.1} parent=1 // pred_check
      _
    $region7: #{tpu_custom_call.1} parent=1 // pred_check_branch
      %37 = sbr.rel (0) target = $region9
    $region8: #{tpu_custom_call.1} parent=1 // pred_region
      %s39 = ssub.s32 128, 128
      %40 = vsyncadd [#allocation10], %s39
      %s42 = sshll.u32 [#allocation9], 4
      %s43 = int_to_ptr.vmem [resolvable:$true] %s42
      %45 = dma.hbm_to_vmem [thread:$0]  %s1, 128, %s43, [#allocation10]
    $region9: #{tpu_custom_call.1} parent=1 // pred_fallthru
      _
    // Predicated region
    $region10: #{tpu_custom_call.1} parent=1 // pred_check
      _
    $region11: #{tpu_custom_call.1} parent=1 // pred_check_branch
      %47 = sbr.rel (0) target = $region13
    $region12: #{tpu_custom_call.1} parent=1 // pred_region
      %s49 = ssub.s32 128, 128
      %50 = vsyncadd [#allocation10], %s49
      %s52 = sshll.u32 [#allocation11], 4
      %s53 = int_to_ptr.vmem [resolvable:$true] %s52
      %55 = dma.hbm_to_vmem [thread:$0]  %s2, 128, %s53, [#allocation10]
    $region13: #{tpu_custom_call.1} parent=1 // pred_fallthru
      _
    // Predicated region
    $region14: #{tpu_custom_call.1} parent=1 // pred_check
      _
    $region15: #{tpu_custom_call.1} parent=1 // pred_check_branch
      %57 = sbr.rel (0) target = $region17
    $region16: #{tpu_custom_call.1} parent=1 // pred_region
      %s59 = ssub.s32 8192, 8192
      %60 = vsyncadd [#allocation13], %s59
      %s61 = sshll.u32 [#allocation12], 4
      %s62 = int_to_ptr.vmem [resolvable:$true] %s61
      %67 = dma.hbm_to_vmem [thread:$0]  %s3, 8192, %s62, [#allocation13], 512, 512, 32
    $region17: #{tpu_custom_call.1} parent=1 // pred_fallthru
      _
    // Predicated region
    $region18: #{tpu_custom_call.1} parent=1 // pred_check
      _
    $region19: #{tpu_custom_call.1} parent=1 // pred_check_branch
      %69 = sbr.rel (0) target = $region21
    $region20: #{tpu_custom_call.1} parent=1 // pred_region
      %s71 = ssub.s32 8192, 8192
      %72 = vsyncadd [#allocation13], %s71
      %s73 = sshll.u32 [#allocation14], 4
      %s74 = int_to_ptr.vmem [resolvable:$true] %s73
      %79 = dma.hbm_to_vmem [thread:$0]  %s4, 8192, %s74, [#allocation13], 512, 512, 32
    $region21: #{tpu_custom_call.1} parent=1 // pred_fallthru
      _
    // Predicated region
    $region22: #{tpu_custom_call.1} parent=1 // pred_check
      _
    $region23: #{tpu_custom_call.1} parent=1 // pred_check_branch
      %81 = sbr.rel (0) target = $region25
    $region24: #{tpu_custom_call.1} parent=1 // pred_region
      _
    $region25: #{tpu_custom_call.1} parent=1 // pred_fallthru
      _
    // Predicated region
    $region26: #{tpu_custom_call.1} parent=1 // pred_check
      _
    $region27: #{tpu_custom_call.1} parent=1 // pred_check_branch
      %83 = sbr.rel (0) target = $region29
    $region28: #{tpu_custom_call.1} parent=1 // pred_region
      %s85 = ssub.s32 2048, 2048
      %86 = vsyncadd [#allocation16], %s85
      %s87 = sshll.u32 [#allocation15], 4
      %s88 = int_to_ptr.vmem [resolvable:$true] %s87
      %93 = dma.hbm_to_vmem [thread:$0]  %s6, 2048, %s88, [#allocation16], 128, 128, 8
    $region29: #{tpu_custom_call.1} parent=1 // pred_fallthru
      _
    // Predicated region
    $region30: #{tpu_custom_call.1} parent=1 // pred_check
      _
    $region31: #{tpu_custom_call.1} parent=1 // pred_check_branch
      %95 = sbr.rel (0) target = $region33
    $region32: #{tpu_custom_call.1} parent=1 // pred_region
      _
    $region33: #{tpu_custom_call.1} parent=1 // pred_fallthru
      _
    // Predicated region
    $region34: #{tpu_custom_call.1} parent=1 // pred_check
      _
    $region35: #{tpu_custom_call.1} parent=1 // pred_check_branch
      %97 = sbr.rel (0) target = $region37
    $region36: #{tpu_custom_call.1} parent=1 // pred_region
      %s99 = ssub.s32 2048, 2048
      %100 = vsyncadd [#allocation16], %s99
      %s101 = sshll.u32 [#allocation17], 4
      %s102 = int_to_ptr.vmem [resolvable:$true] %s101
      %107 = dma.hbm_to_vmem [thread:$0]  %s8, 2048, %s102, [#allocation16], 128, 128, 8
    $region37: #{tpu_custom_call.1} parent=1 // pred_fallthru
      _
    // Predicated region
    $region38: #{tpu_custom_call.1} parent=1 // pred_check
      _
    $region39: #{tpu_custom_call.1} parent=1 // pred_check_branch
      %109 = sbr.rel (0) target = $region41
    $region40: #{tpu_custom_call.1} parent=1 // pred_region
      _
    $region41: #{tpu_custom_call.1} parent=1 // pred_fallthru
      _
    // Predicated region
    $region42: #{tpu_custom_call.1} parent=1 // pred_check
      _
    $region43: #{tpu_custom_call.1} parent=1 // pred_check_branch
      %111 = sbr.rel (0) target = $region45
    $region44: #{tpu_custom_call.1} parent=1 // pred_region
      %112 = dma.done [#allocation7], 1024
    $region45: #{tpu_custom_call.1} parent=1 // pred_fallthru
      _
    // Predicated region
    $region46: #{tpu_custom_call.1} parent=1 // pred_check
      _
    $region47: #{tpu_custom_call.1} parent=1 // pred_check_branch
      %114 = sbr.rel (0) target = $region49
    $region48: #{tpu_custom_call.1} parent=1 // pred_region
      %115 = dma.done [#allocation10], 128
    $region49: #{tpu_custom_call.1} parent=1 // pred_fallthru
      _
    // Predicated region
    $region50: #{tpu_custom_call.1} parent=1 // pred_check
      _
    $region51: #{tpu_custom_call.1} parent=1 // pred_check_branch
      %117 = sbr.rel (0) target = $region53
    $region52: #{tpu_custom_call.1} parent=1 // pred_region
      %118 = dma.done [#allocation10], 128
    $region53: #{tpu_custom_call.1} parent=1 // pred_fallthru
      _
    // Predicated region
    $region54: #{tpu_custom_call.1} parent=1 // pred_check
      _
    $region55: #{tpu_custom_call.1} parent=1 // pred_check_branch
      %120 = sbr.rel (0) target = $region57
    $region56: #{tpu_custom_call.1} parent=1 // pred_region
      %121 = dma.done [#allocation13], 8192
    $region57: #{tpu_custom_call.1} parent=1 // pred_fallthru
      _
    // Predicated region
    $region58: #{tpu_custom_call.1} parent=1 // pred_check
      _
    $region59: #{tpu_custom_call.1} parent=1 // pred_check_branch
      %123 = sbr.rel (0) target = $region61
    $region60: #{tpu_custom_call.1} parent=1 // pred_region
      %124 = dma.done [#allocation13], 8192
    $region61: #{tpu_custom_call.1} parent=1 // pred_fallthru
      _
    // Predicated region
    $region62: #{tpu_custom_call.1} parent=1 // pred_check
      _
    $region63: #{tpu_custom_call.1} parent=1 // pred_check_branch
      %126 = sbr.rel (0) target = $region65
    $region64: #{tpu_custom_call.1} parent=1 // pred_region
      %127 = dma.done [#allocation16], 2048
    $region65: #{tpu_custom_call.1} parent=1 // pred_fallthru
      _
    // Predicated region
    $region66: #{tpu_custom_call.1} parent=1 // pred_check
      _
    $region67: #{tpu_custom_call.1} parent=1 // pred_check_branch
      %129 = sbr.rel (0) target = $region69
    $region68: #{tpu_custom_call.1} parent=1 // pred_region
      %130 = dma.done [#allocation16], 2048
    $region69: #{tpu_custom_call.1} parent=1 // pred_fallthru
      _
    %p131 = scmp.eq.s32.totalorder 0, 0
    // Predicated region
    $region70: #{tpu_custom_call.1} parent=1 // pred_check
      %p132 = pneg %p131
    $region71: #{tpu_custom_call.1} parent=1 // pred_check_branch
      %134 = sbr.rel (%p132) target = $region73
    $region72: #{tpu_custom_call.1} parent=1 // pred_region
      %v135 = vld [vmem:[#allocation9] sm:$0xff]
      %136 = vst [vmem:[#allocation2] sm:$0xff] %v135
      %v137 = vld [vmem:[#allocation11] sm:$0xff]
      %138 = vst [vmem:[#allocation3] sm:$0xff] %v137
    $region73: #{tpu_custom_call.1} parent=1 // pred_fallthru
      _
    %v139 = vld [vmem:[#allocation6] sm:$0xff]
    %v140 = vld [vmem:[#allocation6 + $0x8] sm:$0xff]
    %v141 = vld [vmem:[#allocation6 + $0x10] sm:$0xff]
    %v142 = vld [vmem:[#allocation6 + $0x18] sm:$0xff]
    %v143 = vld [vmem:[#allocation6 + $0x20] sm:$0xff]
    %v144 = vld [vmem:[#allocation6 + $0x28] sm:$0xff]
    %v145 = vld [vmem:[#allocation6 + $0x30] sm:$0xff]
    %v146 = vld [vmem:[#allocation6 + $0x38] sm:$0xff]
    %v147 = vld [vmem:[#allocation12] sm:$0xff]
    %v148 = vld [vmem:[#allocation12 + $0x8] sm:$0xff]
    %v149 = vld [vmem:[#allocation12 + $0x10] sm:$0xff]
    %v150 = vld [vmem:[#allocation12 + $0x18] sm:$0xff]
    %v151 = vld [vmem:[#allocation12 + $0x20] sm:$0xff]
    %v152 = vld [vmem:[#allocation12 + $0x28] sm:$0xff]
    %v153 = vld [vmem:[#allocation12 + $0x30] sm:$0xff]
    %v154 = vld [vmem:[#allocation12 + $0x38] sm:$0xff]
    %v155 = vld [vmem:[#allocation12 + $0x40] sm:$0xff]
    %v156 = vld [vmem:[#allocation12 + $0x48] sm:$0xff]
    %v157 = vld [vmem:[#allocation12 + $0x50] sm:$0xff]
    %v158 = vld [vmem:[#allocation12 + $0x58] sm:$0xff]
    %v159 = vld [vmem:[#allocation12 + $0x60] sm:$0xff]
    %v160 = vld [vmem:[#allocation12 + $0x68] sm:$0xff]
    %v161 = vld [vmem:[#allocation12 + $0x70] sm:$0xff]
    %v162 = vld [vmem:[#allocation12 + $0x78] sm:$0xff]
    %v163 = vld [vmem:[#allocation12 + $0x80] sm:$0xff]
    %v164 = vld [vmem:[#allocation12 + $0x88] sm:$0xff]
    %v165 = vld [vmem:[#allocation12 + $0x90] sm:$0xff]
    %v166 = vld [vmem:[#allocation12 + $0x98] sm:$0xff]
    %v167 = vld [vmem:[#allocation12 + $0xa0] sm:$0xff]
    %v168 = vld [vmem:[#allocation12 + $0xa8] sm:$0xff]
    %v169 = vld [vmem:[#allocation12 + $0xb0] sm:$0xff]
    %v170 = vld [vmem:[#allocation12 + $0xb8] sm:$0xff]
    %v171 = vld [vmem:[#allocation12 + $0xc0] sm:$0xff]
    %v172 = vld [vmem:[#allocation12 + $0xc8] sm:$0xff]
    %v173 = vld [vmem:[#allocation12 + $0xd0] sm:$0xff]
    %v174 = vld [vmem:[#allocation12 + $0xd8] sm:$0xff]
    %v175 = vld [vmem:[#allocation12 + $0xe0] sm:$0xff]
    %v176 = vld [vmem:[#allocation12 + $0xe8] sm:$0xff]
    %v177 = vld [vmem:[#allocation12 + $0xf0] sm:$0xff]
    %v178 = vld [vmem:[#allocation12 + $0xf8] sm:$0xff]
    %v179 = vld [vmem:[#allocation12 + $0x100] sm:$0xff]
    %v180 = vld [vmem:[#allocation12 + $0x108] sm:$0xff]
    %v181 = vld [vmem:[#allocation12 + $0x110] sm:$0xff]
    %v182 = vld [vmem:[#allocation12 + $0x118] sm:$0xff]
    %v183 = vld [vmem:[#allocation12 + $0x120] sm:$0xff]
    %v184 = vld [vmem:[#allocation12 + $0x128] sm:$0xff]
    %v185 = vld [vmem:[#allocation12 + $0x130] sm:$0xff]
    %v186 = vld [vmem:[#allocation12 + $0x138] sm:$0xff]
    %v187 = vld [vmem:[#allocation12 + $0x140] sm:$0xff]
    %v188 = vld [vmem:[#allocation12 + $0x148] sm:$0xff]
    %v189 = vld [vmem:[#allocation12 + $0x150] sm:$0xff]
    %v190 = vld [vmem:[#allocation12 + $0x158] sm:$0xff]
    %v191 = vld [vmem:[#allocation12 + $0x160] sm:$0xff]
    %v192 = vld [vmem:[#allocation12 + $0x168] sm:$0xff]
    %v193 = vld [vmem:[#allocation12 + $0x170] sm:$0xff]
    %v194 = vld [vmem:[#allocation12 + $0x178] sm:$0xff]
    %v195 = vld [vmem:[#allocation12 + $0x180] sm:$0xff]
    %v196 = vld [vmem:[#allocation12 + $0x188] sm:$0xff]
    %v197 = vld [vmem:[#allocation12 + $0x190] sm:$0xff]
    %v198 = vld [vmem:[#allocation12 + $0x198] sm:$0xff]
    %v199 = vld [vmem:[#allocation12 + $0x1a0] sm:$0xff]
    %v200 = vld [vmem:[#allocation12 + $0x1a8] sm:$0xff]
    %v201 = vld [vmem:[#allocation12 + $0x1b0] sm:$0xff]
    %v202 = vld [vmem:[#allocation12 + $0x1b8] sm:$0xff]
    %v203 = vld [vmem:[#allocation12 + $0x1c0] sm:$0xff]
    %v204 = vld [vmem:[#allocation12 + $0x1c8] sm:$0xff]
    %v205 = vld [vmem:[#allocation12 + $0x1d0] sm:$0xff]
    %v206 = vld [vmem:[#allocation12 + $0x1d8] sm:$0xff]
    %v207 = vld [vmem:[#allocation12 + $0x1e0] sm:$0xff]
    %v208 = vld [vmem:[#allocation12 + $0x1e8] sm:$0xff]
    %v209 = vld [vmem:[#allocation12 + $0x1f0] sm:$0xff]
    %v210 = vld [vmem:[#allocation12 + $0x1f8] sm:$0xff]
    %v211 = vld [vmem:[%s5] sm:$0xf]
    %v213 = vlaneseq
    %v214 = vshrl.u32 %v213, 7
    %v215 = vsub.s32 0, %v214
    %v216 = vrot.slane %v211, %v215
    %v217 = vlaneseq
    %v218 = vshrl.u32 %v217, 7
    %v219 = vsub.s32 1, %v218
    %v220 = vrot.slane %v211, %v219
    %v221 = vlaneseq
    %v222 = vshrl.u32 %v221, 7
    %v223 = vsub.s32 2, %v222
    %v224 = vrot.slane %v211, %v223
    %v225 = vlaneseq
    %v226 = vshrl.u32 %v225, 7
    %v227 = vsub.s32 3, %v226
    %v228 = vrot.slane %v211, %v227
    %233 = vmatprep.subr.mxu0 %v208
    %234 = vmatpush1.msra.mxu0 %v207
    %235 = vmatprep.subr.mxu0 %v204
    %236 = vmatpush1.msra.mxu0 %v203
    %237 = vmatprep.subr.mxu0 %v200
    %238 = vmatpush1.msra.mxu0 %v199
    %239 = vmatprep.subr.mxu0 %v196
    %240 = vmatpush1.msra.mxu0 %v195
    %241 = vmatprep.subr.mxu0 %v192
    %242 = vmatpush1.msra.mxu0 %v191
    %243 = vmatprep.subr.mxu0 %v188
    %244 = vmatpush1.msra.mxu0 %v187
    %245 = vmatprep.subr.mxu0 %v184
    %246 = vmatpush1.msra.mxu0 %v183
    %247 = vmatprep.subr.mxu0 %v180
    %248 = vmatpush1.msra.mxu0 %v179
    %249 = vmatprep.subr.mxu0 %v176
    %250 = vmatpush1.msra.mxu0 %v175
    %251 = vmatprep.subr.mxu0 %v172
    %252 = vmatpush1.msra.mxu0 %v171
    %253 = vmatprep.subr.mxu0 %v168
    %254 = vmatpush1.msra.mxu0 %v167
    %255 = vmatprep.subr.mxu0 %v164
    %256 = vmatpush1.msra.mxu0 %v163
    %257 = vmatprep.subr.mxu0 %v160
    %258 = vmatpush1.msra.mxu0 %v159
    %259 = vmatprep.subr.mxu0 %v156
    %260 = vmatpush1.msra.mxu0 %v155
    %261 = vmatprep.subr.mxu0 %v152
    %262 = vmatpush1.msra.mxu0 %v151
    %263 = vmatprep.subr.mxu0 %v148
    %264 = vmatpush1.msra.mxu0 %v147
    %265 = vmatprep.subr.mxu0 0.0
    %266 = vmatpush2.msra.mxu0 0.0
    %267 = vmatprep.subr.mxu0 0.0
    %268 = vmatpush2.msra.mxu0 0.0
    %269 = vmatprep.subr.mxu0 0.0
    %270 = vmatpush2.msra.mxu0 0.0
    %271 = vmatprep.subr.mxu0 0.0
    %272 = vmatpush2.msra.mxu0 0.0
    %273 = vmatprep.subr.mxu0 0.0
    %274 = vmatpush2.msra.mxu0 0.0
    %275 = vmatprep.subr.mxu0 0.0
    %276 = vmatpush2.msra.mxu0 0.0
    %277 = vmatprep.subr.mxu0 0.0
    %278 = vmatpush2.msra.mxu0 0.0
    %279 = vmatprep.subr.mxu0 0.0
    %280 = vmatpush2.msra.mxu0 0.0
    %281 = vmatprep.subr.mxu0 0.0
    %282 = vmatpush2.msra.mxu0 0.0
    %283 = vmatprep.subr.mxu0 0.0
    %284 = vmatpush2.msra.mxu0 0.0
    %285 = vmatprep.subr.mxu0 0.0
    %286 = vmatpush2.msra.mxu0 0.0
    %287 = vmatprep.subr.mxu0 0.0
    %288 = vmatpush2.msra.mxu0 0.0
    %289 = vmatprep.subr.mxu0 0.0
    %290 = vmatpush2.msra.mxu0 0.0
    %291 = vmatprep.subr.mxu0 0.0
    %292 = vmatpush2.msra.mxu0 0.0
    %293 = vmatprep.subr.mxu0 0.0
    %294 = vmatpush2.msra.mxu0 0.0
    %295 = vmatprep.subr.mxu0 0.0
    %296 = vmatpush2.msra.mxu0 0.0
    %297 = vmatprep.mubr.f32.mxu0 0.0
    %298 = vmatmul.mubr.f32.gmra.mxu0 %v139
    %v299 = vpop.f32.mrf.mxu0
    %v300 = vadd.f32 %v216, %v299
    %v301 = vpop.f32.mrf.mxu0
    %v302 = vadd.f32 %v220, %v301
    %303 = vmatprep.mubr.f32.mxu0 0.0
    %304 = vmatmul.mubr.f32.gmra.mxu0 %v140
    %v305 = vpop.f32.mrf.mxu0
    %v306 = vadd.f32 %v216, %v305
    %v307 = vpop.f32.mrf.mxu0
    %v308 = vadd.f32 %v220, %v307
    %309 = vmatprep.mubr.f32.mxu0 0.0
    %310 = vmatmul.mubr.f32.gmra.mxu0 %v141
    %v311 = vpop.f32.mrf.mxu0
    %v312 = vadd.f32 %v216, %v311
    %v313 = vpop.f32.mrf.mxu0
    %v314 = vadd.f32 %v220, %v313
    %315 = vmatprep.mubr.f32.mxu0 0.0
    %316 = vmatmul.mubr.f32.gmra.mxu0 %v142
    %v317 = vpop.f32.mrf.mxu0
    %v318 = vadd.f32 %v216, %v317
    %v319 = vpop.f32.mrf.mxu0
    %v320 = vadd.f32 %v220, %v319
    %321 = vmatprep.mubr.f32.mxu0 0.0
    %322 = vmatmul.mubr.f32.gmra.mxu0 %v143
    %v323 = vpop.f32.mrf.mxu0
    %v324 = vadd.f32 %v216, %v323
    %v325 = vpop.f32.mrf.mxu0
    %v326 = vadd.f32 %v220, %v325
    %327 = vmatprep.mubr.f32.mxu0 0.0
    %328 = vmatmul.mubr.f32.gmra.mxu0 %v144
    %v329 = vpop.f32.mrf.mxu0
    %v330 = vadd.f32 %v216, %v329
    %v331 = vpop.f32.mrf.mxu0
    %v332 = vadd.f32 %v220, %v331
    %333 = vmatprep.mubr.f32.mxu0 0.0
    %334 = vmatmul.mubr.f32.gmra.mxu0 %v145
    %v335 = vpop.f32.mrf.mxu0
    %v336 = vadd.f32 %v216, %v335
    %v337 = vpop.f32.mrf.mxu0
    %v338 = vadd.f32 %v220, %v337
    %339 = vmatprep.mubr.f32.mxu0 0.0
    %340 = vmatmul.mubr.f32.gmra.mxu0 %v146
    %v341 = vpop.f32.mrf.mxu0
    %v342 = vadd.f32 %v216, %v341
    %v343 = vpop.f32.mrf.mxu0
    %v344 = vadd.f32 %v220, %v343
    %345 = vdwg.mxu0
    %346 = vmatprep.subr.mxu0 %v210
    %347 = vmatpush1.msra.mxu0 %v209
    %348 = vmatprep.subr.mxu0 %v206
    %349 = vmatpush1.msra.mxu0 %v205
    %350 = vmatprep.subr.mxu0 %v202
    %351 = vmatpush1.msra.mxu0 %v201
    %352 = vmatprep.subr.mxu0 %v198
    %353 = vmatpush1.msra.mxu0 %v197
    %354 = vmatprep.subr.mxu0 %v194
    %355 = vmatpush1.msra.mxu0 %v193
    %356 = vmatprep.subr.mxu0 %v190
    %357 = vmatpush1.msra.mxu0 %v189
    %358 = vmatprep.subr.mxu0 %v186
    %359 = vmatpush1.msra.mxu0 %v185
    %360 = vmatprep.subr.mxu0 %v182
    %361 = vmatpush1.msra.mxu0 %v181
    %362 = vmatprep.subr.mxu0 %v178
    %363 = vmatpush1.msra.mxu0 %v177
    %364 = vmatprep.subr.mxu0 %v174
    %365 = vmatpush1.msra.mxu0 %v173
    %366 = vmatprep.subr.mxu0 %v170
    %367 = vmatpush1.msra.mxu0 %v169
    %368 = vmatprep.subr.mxu0 %v166
    %369 = vmatpush1.msra.mxu0 %v165
    %370 = vmatprep.subr.mxu0 %v162
    %371 = vmatpush1.msra.mxu0 %v161
    %372 = vmatprep.subr.mxu0 %v158
    %373 = vmatpush1.msra.mxu0 %v157
    %374 = vmatprep.subr.mxu0 %v154
    %375 = vmatpush1.msra.mxu0 %v153
    %376 = vmatprep.subr.mxu0 %v150
    %377 = vmatpush1.msra.mxu0 %v149
    %378 = vmatprep.subr.mxu0 0.0
    %379 = vmatpush2.msra.mxu0 0.0
    %380 = vmatprep.subr.mxu0 0.0
    %381 = vmatpush2.msra.mxu0 0.0
    %382 = vmatprep.subr.mxu0 0.0
    %383 = vmatpush2.msra.mxu0 0.0
    %384 = vmatprep.subr.mxu0 0.0
    %385 = vmatpush2.msra.mxu0 0.0
    %386 = vmatprep.subr.mxu0 0.0
    %387 = vmatpush2.msra.mxu0 0.0
    %388 = vmatprep.subr.mxu0 0.0
    %389 = vmatpush2.msra.mxu0 0.0
    %390 = vmatprep.subr.mxu0 0.0
    %391 = vmatpush2.msra.mxu0 0.0
    %392 = vmatprep.subr.mxu0 0.0
    %393 = vmatpush2.msra.mxu0 0.0
    %394 = vmatprep.subr.mxu0 0.0
    %395 = vmatpush2.msra.mxu0 0.0
    %396 = vmatprep.subr.mxu0 0.0
    %397 = vmatpush2.msra.mxu0 0.0
    %398 = vmatprep.subr.mxu0 0.0
    %399 = vmatpush2.msra.mxu0 0.0
    %400 = vmatprep.subr.mxu0 0.0
    %401 = vmatpush2.msra.mxu0 0.0
    %402 = vmatprep.subr.mxu0 0.0
    %403 = vmatpush2.msra.mxu0 0.0
    %404 = vmatprep.subr.mxu0 0.0
    %405 = vmatpush2.msra.mxu0 0.0
    %406 = vmatprep.subr.mxu0 0.0
    %407 = vmatpush2.msra.mxu0 0.0
    %408 = vmatprep.subr.mxu0 0.0
    %409 = vmatpush2.msra.mxu0 0.0
    %410 = vmatprep.mubr.f32.mxu0 0.0
    %411 = vmatmul.mubr.f32.gmra.mxu0 %v139
    %v412 = vpop.f32.mrf.mxu0
    %v413 = vadd.f32 %v224, %v412
    %v414 = vpop.f32.mrf.mxu0
    %v415 = vadd.f32 %v228, %v414
    %416 = vmatprep.mubr.f32.mxu0 0.0
    %417 = vmatmul.mubr.f32.gmra.mxu0 %v140
    %v418 = vpop.f32.mrf.mxu0
    %v419 = vadd.f32 %v224, %v418
    %v420 = vpop.f32.mrf.mxu0
    %v421 = vadd.f32 %v228, %v420
    %422 = vmatprep.mubr.f32.mxu0 0.0
    %423 = vmatmul.mubr.f32.gmra.mxu0 %v141
    %v424 = vpop.f32.mrf.mxu0
    %v425 = vadd.f32 %v224, %v424
    %v426 = vpop.f32.mrf.mxu0
    %v427 = vadd.f32 %v228, %v426
    %428 = vmatprep.mubr.f32.mxu0 0.0
    %429 = vmatmul.mubr.f32.gmra.mxu0 %v142
    %v430 = vpop.f32.mrf.mxu0
    %v431 = vadd.f32 %v224, %v430
    %v432 = vpop.f32.mrf.mxu0
    %v433 = vadd.f32 %v228, %v432
    %434 = vmatprep.mubr.f32.mxu0 0.0
    %435 = vmatmul.mubr.f32.gmra.mxu0 %v143
    %v436 = vpop.f32.mrf.mxu0
    %v437 = vadd.f32 %v224, %v436
    %v438 = vpop.f32.mrf.mxu0
    %v439 = vadd.f32 %v228, %v438
    %440 = vmatprep.mubr.f32.mxu0 0.0
    %441 = vmatmul.mubr.f32.gmra.mxu0 %v144
    %v442 = vpop.f32.mrf.mxu0
    %v443 = vadd.f32 %v224, %v442
    %v444 = vpop.f32.mrf.mxu0
    %v445 = vadd.f32 %v228, %v444
    %446 = vmatprep.mubr.f32.mxu0 0.0
    %447 = vmatmul.mubr.f32.gmra.mxu0 %v145
    %v448 = vpop.f32.mrf.mxu0
    %v449 = vadd.f32 %v224, %v448
    %v450 = vpop.f32.mrf.mxu0
    %v451 = vadd.f32 %v228, %v450
    %452 = vmatprep.mubr.f32.mxu0 0.0
    %453 = vmatmul.mubr.f32.gmra.mxu0 %v146
    %v454 = vpop.f32.mrf.mxu0
    %v455 = vadd.f32 %v224, %v454
    %v456 = vpop.f32.mrf.mxu0
    %v457 = vadd.f32 %v228, %v456
    %458 = vdwg.mxu0
    %459 = vst [vmem:[#allocation4] sm:$0xff] %v300
    %460 = vst [vmem:[#allocation4 + $0x8] sm:$0xff] %v302
    %461 = vst [vmem:[#allocation4 + $0x10] sm:$0xff] %v413
    %462 = vst [vmem:[#allocation4 + $0x18] sm:$0xff] %v415
    %463 = vst [vmem:[#allocation4 + $0x20] sm:$0xff] %v306
    %464 = vst [vmem:[#allocation4 + $0x28] sm:$0xff] %v308
    %465 = vst [vmem:[#allocation4 + $0x30] sm:$0xff] %v419
    %466 = vst [vmem:[#allocation4 + $0x38] sm:$0xff] %v421
    %467 = vst [vmem:[#allocation4 + $0x40] sm:$0xff] %v312
    %468 = vst [vmem:[#allocation4 + $0x48] sm:$0xff] %v314
    %469 = vst [vmem:[#allocation4 + $0x50] sm:$0xff] %v425
    %470 = vst [vmem:[#allocation4 + $0x58] sm:$0xff] %v427
    %471 = vst [vmem:[#allocation4 + $0x60] sm:$0xff] %v318
    %472 = vst [vmem:[#allocation4 + $0x68] sm:$0xff] %v320
    %473 = vst [vmem:[#allocation4 + $0x70] sm:$0xff] %v431
    %474 = vst [vmem:[#allocation4 + $0x78] sm:$0xff] %v433
    %475 = vst [vmem:[#allocation4 + $0x80] sm:$0xff] %v324
    %476 = vst [vmem:[#allocation4 + $0x88] sm:$0xff] %v326
    %477 = vst [vmem:[#allocation4 + $0x90] sm:$0xff] %v437
    %478 = vst [vmem:[#allocation4 + $0x98] sm:$0xff] %v439
    %479 = vst [vmem:[#allocation4 + $0xa0] sm:$0xff] %v330
    %480 = vst [vmem:[#allocation4 + $0xa8] sm:$0xff] %v332
    %481 = vst [vmem:[#allocation4 + $0xb0] sm:$0xff] %v443
    %482 = vst [vmem:[#allocation4 + $0xb8] sm:$0xff] %v445
    %483 = vst [vmem:[#allocation4 + $0xc0] sm:$0xff] %v336
    %484 = vst [vmem:[#allocation4 + $0xc8] sm:$0xff] %v338
    %485 = vst [vmem:[#allocation4 + $0xd0] sm:$0xff] %v449
    %486 = vst [vmem:[#allocation4 + $0xd8] sm:$0xff] %v451
    %487 = vst [vmem:[#allocation4 + $0xe0] sm:$0xff] %v342
    %488 = vst [vmem:[#allocation4 + $0xe8] sm:$0xff] %v344
    %489 = vst [vmem:[#allocation4 + $0xf0] sm:$0xff] %v455
    %490 = vst [vmem:[#allocation4 + $0xf8] sm:$0xff] %v457
    %v491 = vld [vmem:[#allocation14] sm:$0xff]
    %v492 = vld [vmem:[#allocation14 + $0x8] sm:$0xff]
    %v493 = vld [vmem:[#allocation14 + $0x10] sm:$0xff]
    %v494 = vld [vmem:[#allocation14 + $0x18] sm:$0xff]
    %v495 = vld [vmem:[#allocation14 + $0x20] sm:$0xff]
    %v496 = vld [vmem:[#allocation14 + $0x28] sm:$0xff]
    %v497 = vld [vmem:[#allocation14 + $0x30] sm:$0xff]
    %v498 = vld [vmem:[#allocation14 + $0x38] sm:$0xff]
    %v499 = vld [vmem:[#allocation14 + $0x40] sm:$0xff]
    %v500 = vld [vmem:[#allocation14 + $0x48] sm:$0xff]
    %v501 = vld [vmem:[#allocation14 + $0x50] sm:$0xff]
    %v502 = vld [vmem:[#allocation14 + $0x58] sm:$0xff]
    %v503 = vld [vmem:[#allocation14 + $0x60] sm:$0xff]
    %v504 = vld [vmem:[#allocation14 + $0x68] sm:$0xff]
    %v505 = vld [vmem:[#allocation14 + $0x70] sm:$0xff]
    %v506 = vld [vmem:[#allocation14 + $0x78] sm:$0xff]
    %v507 = vld [vmem:[#allocation14 + $0x80] sm:$0xff]
    %v508 = vld [vmem:[#allocation14 + $0x88] sm:$0xff]
    %v509 = vld [vmem:[#allocation14 + $0x90] sm:$0xff]
    %v510 = vld [vmem:[#allocation14 + $0x98] sm:$0xff]
    %v511 = vld [vmem:[#allocation14 + $0xa0] sm:$0xff]
    %v512 = vld [vmem:[#allocation14 + $0xa8] sm:$0xff]
    %v513 = vld [vmem:[#allocation14 + $0xb0] sm:$0xff]
    %v514 = vld [vmem:[#allocation14 + $0xb8] sm:$0xff]
    %v515 = vld [vmem:[#allocation14 + $0xc0] sm:$0xff]
    %v516 = vld [vmem:[#allocation14 + $0xc8] sm:$0xff]
    %v517 = vld [vmem:[#allocation14 + $0xd0] sm:$0xff]
    %v518 = vld [vmem:[#allocation14 + $0xd8] sm:$0xff]
    %v519 = vld [vmem:[#allocation14 + $0xe0] sm:$0xff]
    %v520 = vld [vmem:[#allocation14 + $0xe8] sm:$0xff]
    %v521 = vld [vmem:[#allocation14 + $0xf0] sm:$0xff]
    %v522 = vld [vmem:[#allocation14 + $0xf8] sm:$0xff]
    %v523 = vld [vmem:[#allocation14 + $0x100] sm:$0xff]
    %v524 = vld [vmem:[#allocation14 + $0x108] sm:$0xff]
    %v525 = vld [vmem:[#allocation14 + $0x110] sm:$0xff]
    %v526 = vld [vmem:[#allocation14 + $0x118] sm:$0xff]
    %v527 = vld [vmem:[#allocation14 + $0x120] sm:$0xff]
    %v528 = vld [vmem:[#allocation14 + $0x128] sm:$0xff]
    %v529 = vld [vmem:[#allocation14 + $0x130] sm:$0xff]
    %v530 = vld [vmem:[#allocation14 + $0x138] sm:$0xff]
    %v531 = vld [vmem:[#allocation14 + $0x140] sm:$0xff]
    %v532 = vld [vmem:[#allocation14 + $0x148] sm:$0xff]
    %v533 = vld [vmem:[#allocation14 + $0x150] sm:$0xff]
    %v534 = vld [vmem:[#allocation14 + $0x158] sm:$0xff]
    %v535 = vld [vmem:[#allocation14 + $0x160] sm:$0xff]
    %v536 = vld [vmem:[#allocation14 + $0x168] sm:$0xff]
    %v537 = vld [vmem:[#allocation14 + $0x170] sm:$0xff]
    %v538 = vld [vmem:[#allocation14 + $0x178] sm:$0xff]
    %v539 = vld [vmem:[#allocation14 + $0x180] sm:$0xff]
    %v540 = vld [vmem:[#allocation14 + $0x188] sm:$0xff]
    %v541 = vld [vmem:[#allocation14 + $0x190] sm:$0xff]
    %v542 = vld [vmem:[#allocation14 + $0x198] sm:$0xff]
    %v543 = vld [vmem:[#allocation14 + $0x1a0] sm:$0xff]
    %v544 = vld [vmem:[#allocation14 + $0x1a8] sm:$0xff]
    %v545 = vld [vmem:[#allocation14 + $0x1b0] sm:$0xff]
    %v546 = vld [vmem:[#allocation14 + $0x1b8] sm:$0xff]
    %v547 = vld [vmem:[#allocation14 + $0x1c0] sm:$0xff]
    %v548 = vld [vmem:[#allocation14 + $0x1c8] sm:$0xff]
    %v549 = vld [vmem:[#allocation14 + $0x1d0] sm:$0xff]
    %v550 = vld [vmem:[#allocation14 + $0x1d8] sm:$0xff]
    %v551 = vld [vmem:[#allocation14 + $0x1e0] sm:$0xff]
    %v552 = vld [vmem:[#allocation14 + $0x1e8] sm:$0xff]
    %v553 = vld [vmem:[#allocation14 + $0x1f0] sm:$0xff]
    %v554 = vld [vmem:[#allocation14 + $0x1f8] sm:$0xff]
    %v555 = vld [vmem:[#allocation2] sm:$0xff]
    %v556 = vld [vmem:[#allocation3] sm:$0xff]
    %s557 = smul.u32 0, 4
    %s558 = smul.addr %s557, 8
    %s559 = scalar_lea.vmem [#allocation4], %s558
    %v560 = vld [vmem:[%s559] sm:$0xff]
    %v561 = vld [vmem:[%s559 + $0x8] sm:$0xff]
    %v562 = vld [vmem:[%s559 + $0x10] sm:$0xff]
    %v563 = vld [vmem:[%s559 + $0x18] sm:$0xff]
    %564 = vmatprep.subr.mxu0 %v552
    %565 = vmatpush1.msra.mxu0 %v551
    %566 = vmatprep.subr.mxu0 %v548
    %567 = vmatpush1.msra.mxu0 %v547
    %568 = vmatprep.subr.mxu0 %v544
    %569 = vmatpush1.msra.mxu0 %v543
    %570 = vmatprep.subr.mxu0 %v540
    %571 = vmatpush1.msra.mxu0 %v539
    %572 = vmatprep.subr.mxu0 %v536
    %573 = vmatpush1.msra.mxu0 %v535
    %574 = vmatprep.subr.mxu0 %v532
    %575 = vmatpush1.msra.mxu0 %v531
    %576 = vmatprep.subr.mxu0 %v528
    %577 = vmatpush1.msra.mxu0 %v527
    %578 = vmatprep.subr.mxu0 %v524
    %579 = vmatpush1.msra.mxu0 %v523
    %580 = vmatprep.subr.mxu0 %v520
    %581 = vmatpush1.msra.mxu0 %v519
    %582 = vmatprep.subr.mxu0 %v516
    %583 = vmatpush1.msra.mxu0 %v515
    %584 = vmatprep.subr.mxu0 %v512
    %585 = vmatpush1.msra.mxu0 %v511
    %586 = vmatprep.subr.mxu0 %v508
    %587 = vmatpush1.msra.mxu0 %v507
    %588 = vmatprep.subr.mxu0 %v504
    %589 = vmatpush1.msra.mxu0 %v503
    %590 = vmatprep.subr.mxu0 %v500
    %591 = vmatpush1.msra.mxu0 %v499
    %592 = vmatprep.subr.mxu0 %v496
    %593 = vmatpush1.msra.mxu0 %v495
    %594 = vmatprep.subr.mxu0 %v492
    %595 = vmatpush1.msra.mxu0 %v491
    %596 = vmatprep.subr.mxu0 0.0
    %597 = vmatpush2.msra.mxu0 0.0
    %598 = vmatprep.subr.mxu0 0.0
    %599 = vmatpush2.msra.mxu0 0.0
    %600 = vmatprep.subr.mxu0 0.0
    %601 = vmatpush2.msra.mxu0 0.0
    %602 = vmatprep.subr.mxu0 0.0
    %603 = vmatpush2.msra.mxu0 0.0
    %604 = vmatprep.subr.mxu0 0.0
    %605 = vmatpush2.msra.mxu0 0.0
    %606 = vmatprep.subr.mxu0 0.0
    %607 = vmatpush2.msra.mxu0 0.0
    %608 = vmatprep.subr.mxu0 0.0
    %609 = vmatpush2.msra.mxu0 0.0
    %610 = vmatprep.subr.mxu0 0.0
    %611 = vmatpush2.msra.mxu0 0.0
    %612 = vmatprep.subr.mxu0 0.0
    %613 = vmatpush2.msra.mxu0 0.0
    %614 = vmatprep.subr.mxu0 0.0
    %615 = vmatpush2.msra.mxu0 0.0
    %616 = vmatprep.subr.mxu0 0.0
    %617 = vmatpush2.msra.mxu0 0.0
    %618 = vmatprep.subr.mxu0 0.0
    %619 = vmatpush2.msra.mxu0 0.0
    %620 = vmatprep.subr.mxu0 0.0
    %621 = vmatpush2.msra.mxu0 0.0
    %622 = vmatprep.subr.mxu0 0.0
    %623 = vmatpush2.msra.mxu0 0.0
    %624 = vmatprep.subr.mxu0 0.0
    %625 = vmatpush2.msra.mxu0 0.0
    %626 = vmatprep.subr.mxu0 0.0
    %627 = vmatpush2.msra.mxu0 0.0
    %628 = vmatprep.mubr.f32.mxu0 0.0
    %629 = vmatmul.mubr.f32.gmra.mxu0 %v555
    %v630 = vpop.f32.mrf.mxu0
    %v631 = vadd.f32 0.0, %v630
    %v632 = vpop.f32.mrf.mxu0
    %v633 = vadd.f32 0.0, %v632
    %634 = vdwg.mxu0
    %635 = vmatprep.subr.mxu0 %v554
    %636 = vmatpush1.msra.mxu0 %v553
    %637 = vmatprep.subr.mxu0 %v550
    %638 = vmatpush1.msra.mxu0 %v549
    %639 = vmatprep.subr.mxu0 %v546
    %640 = vmatpush1.msra.mxu0 %v545
    %641 = vmatprep.subr.mxu0 %v542
    %642 = vmatpush1.msra.mxu0 %v541
    %643 = vmatprep.subr.mxu0 %v538
    %644 = vmatpush1.msra.mxu0 %v537
    %645 = vmatprep.subr.mxu0 %v534
    %646 = vmatpush1.msra.mxu0 %v533
    %647 = vmatprep.subr.mxu0 %v530
    %648 = vmatpush1.msra.mxu0 %v529
    %649 = vmatprep.subr.mxu0 %v526
    %650 = vmatpush1.msra.mxu0 %v525
    %651 = vmatprep.subr.mxu0 %v522
    %652 = vmatpush1.msra.mxu0 %v521
    %653 = vmatprep.subr.mxu0 %v518
    %654 = vmatpush1.msra.mxu0 %v517
    %655 = vmatprep.subr.mxu0 %v514
    %656 = vmatpush1.msra.mxu0 %v513
    %657 = vmatprep.subr.mxu0 %v510
    %658 = vmatpush1.msra.mxu0 %v509
    %659 = vmatprep.subr.mxu0 %v506
    %660 = vmatpush1.msra.mxu0 %v505
    %661 = vmatprep.subr.mxu0 %v502
    %662 = vmatpush1.msra.mxu0 %v501
    %663 = vmatprep.subr.mxu0 %v498
    %664 = vmatpush1.msra.mxu0 %v497
    %665 = vmatprep.subr.mxu0 %v494
    %666 = vmatpush1.msra.mxu0 %v493
    %667 = vmatprep.subr.mxu0 0.0
    %668 = vmatpush2.msra.mxu0 0.0
    %669 = vmatprep.subr.mxu0 0.0
    %670 = vmatpush2.msra.mxu0 0.0
    %671 = vmatprep.subr.mxu0 0.0
    %672 = vmatpush2.msra.mxu0 0.0
    %673 = vmatprep.subr.mxu0 0.0
    %674 = vmatpush2.msra.mxu0 0.0
    %675 = vmatprep.subr.mxu0 0.0
    %676 = vmatpush2.msra.mxu0 0.0
    %677 = vmatprep.subr.mxu0 0.0
    %678 = vmatpush2.msra.mxu0 0.0
    %679 = vmatprep.subr.mxu0 0.0
    %680 = vmatpush2.msra.mxu0 0.0
    %681 = vmatprep.subr.mxu0 0.0
    %682 = vmatpush2.msra.mxu0 0.0
    %683 = vmatprep.subr.mxu0 0.0
    %684 = vmatpush2.msra.mxu0 0.0
    %685 = vmatprep.subr.mxu0 0.0
    %686 = vmatpush2.msra.mxu0 0.0
    %687 = vmatprep.subr.mxu0 0.0
    %688 = vmatpush2.msra.mxu0 0.0
    %689 = vmatprep.subr.mxu0 0.0
    %690 = vmatpush2.msra.mxu0 0.0
    %691 = vmatprep.subr.mxu0 0.0
    %692 = vmatpush2.msra.mxu0 0.0
    %693 = vmatprep.subr.mxu0 0.0
    %694 = vmatpush2.msra.mxu0 0.0
    %695 = vmatprep.subr.mxu0 0.0
    %696 = vmatpush2.msra.mxu0 0.0
    %697 = vmatprep.subr.mxu0 0.0
    %698 = vmatpush2.msra.mxu0 0.0
    %699 = vmatprep.mubr.f32.mxu0 0.0
    %700 = vmatmul.mubr.f32.gmra.mxu0 %v555
    %v701 = vpop.f32.mrf.mxu0
    %v702 = vadd.f32 0.0, %v701
    %v703 = vpop.f32.mrf.mxu0
    %v704 = vadd.f32 0.0, %v703
    %705 = vdwg.mxu0
    %v706 = vadd.f32 %v560, %v631
    %v707 = vadd.f32 %v561, %v633
    %v708 = vadd.f32 %v562, %v702
    %v709 = vadd.f32 %v563, %v704
    %v710 = vxor.u32 %v706, 2147483648
    %v711 = vxor.u32 %v707, 2147483648
    %v712 = vxor.u32 %v708, 2147483648
    %v713 = vmul.f32 %v710, 1.442695
    %v714 = vpow.pop %v713
    %v715 = vmul.f32 %v711, 1.442695
    %v716 = vpow.pop %v715
    %v717 = vmul.f32 %v712, 1.442695
    %v718 = vpow.pop %v717
    %v719 = vadd.f32 %v714, 1.0
    %v720 = vadd.f32 %v716, 1.0
    %v721 = vadd.f32 %v718, 1.0
    %v722 = vrcp.pop %v719
    %v723 = vmul.f32 1.0, %v722
    %v724 = vrcp.pop %v720
    %v725 = vmul.f32 1.0, %v724
    %v726 = vrcp.pop %v721
    %v727 = vmul.f32 1.0, %v726
    %v728 = vtanh.pop %v709
    %v729 = vmul.f32 %v725, %v556
    %v730 = vmul.f32 %v723, %v728
    %v731 = vadd.f32 %v729, %v730
    %v732 = vtanh.pop %v731
    %v733 = vmul.f32 %v727, %v732
    %734 = vst [vmem:[#allocation5] sm:$0xff] %v733
    %s735 = smul.u32 1, 4
    %s736 = smul.addr %s735, 8
    %s737 = scalar_lea.vmem [#allocation4], %s736
    %v738 = vld [vmem:[%s737] sm:$0xff]
    %v739 = vld [vmem:[%s737 + $0x8] sm:$0xff]
    %v740 = vld [vmem:[%s737 + $0x10] sm:$0xff]
    %v741 = vld [vmem:[%s737 + $0x18] sm:$0xff]
    %742 = vmatprep.subr.mxu0 %v552
    %743 = vmatpush1.msra.mxu0 %v551
    %744 = vmatprep.subr.mxu0 %v548
    %745 = vmatpush1.msra.mxu0 %v547
    %746 = vmatprep.subr.mxu0 %v544
    %747 = vmatpush1.msra.mxu0 %v543
    %748 = vmatprep.subr.mxu0 %v540
    %749 = vmatpush1.msra.mxu0 %v539
    %750 = vmatprep.subr.mxu0 %v536
    %751 = vmatpush1.msra.mxu0 %v535
    %752 = vmatprep.subr.mxu0 %v532
    %753 = vmatpush1.msra.mxu0 %v531
    %754 = vmatprep.subr.mxu0 %v528
    %755 = vmatpush1.msra.mxu0 %v527
    %756 = vmatprep.subr.mxu0 %v524
    %757 = vmatpush1.msra.mxu0 %v523
    %758 = vmatprep.subr.mxu0 %v520
    %759 = vmatpush1.msra.mxu0 %v519
    %760 = vmatprep.subr.mxu0 %v516
    %761 = vmatpush1.msra.mxu0 %v515
    %762 = vmatprep.subr.mxu0 %v512
    %763 = vmatpush1.msra.mxu0 %v511
    %764 = vmatprep.subr.mxu0 %v508
    %765 = vmatpush1.msra.mxu0 %v507
    %766 = vmatprep.subr.mxu0 %v504
    %767 = vmatpush1.msra.mxu0 %v503
    %768 = vmatprep.subr.mxu0 %v500
    %769 = vmatpush1.msra.mxu0 %v499
    %770 = vmatprep.subr.mxu0 %v496
    %771 = vmatpush1.msra.mxu0 %v495
    %772 = vmatprep.subr.mxu0 %v492
    %773 = vmatpush1.msra.mxu0 %v491
    %774 = vmatprep.subr.mxu0 0.0
    %775 = vmatpush2.msra.mxu0 0.0
    %776 = vmatprep.subr.mxu0 0.0
    %777 = vmatpush2.msra.mxu0 0.0
    %778 = vmatprep.subr.mxu0 0.0
    %779 = vmatpush2.msra.mxu0 0.0
    %780 = vmatprep.subr.mxu0 0.0
    %781 = vmatpush2.msra.mxu0 0.0
    %782 = vmatprep.subr.mxu0 0.0
    %783 = vmatpush2.msra.mxu0 0.0
    %784 = vmatprep.subr.mxu0 0.0
    %785 = vmatpush2.msra.mxu0 0.0
    %786 = vmatprep.subr.mxu0 0.0
    %787 = vmatpush2.msra.mxu0 0.0
    %788 = vmatprep.subr.mxu0 0.0
    %789 = vmatpush2.msra.mxu0 0.0
    %790 = vmatprep.subr.mxu0 0.0
    %791 = vmatpush2.msra.mxu0 0.0
    %792 = vmatprep.subr.mxu0 0.0
    %793 = vmatpush2.msra.mxu0 0.0
    %794 = vmatprep.subr.mxu0 0.0
    %795 = vmatpush2.msra.mxu0 0.0
    %796 = vmatprep.subr.mxu0 0.0
    %797 = vmatpush2.msra.mxu0 0.0
    %798 = vmatprep.subr.mxu0 0.0
    %799 = vmatpush2.msra.mxu0 0.0
    %800 = vmatprep.subr.mxu0 0.0
    %801 = vmatpush2.msra.mxu0 0.0
    %802 = vmatprep.subr.mxu0 0.0
    %803 = vmatpush2.msra.mxu0 0.0
    %804 = vmatprep.subr.mxu0 0.0
    %805 = vmatpush2.msra.mxu0 0.0
    %806 = vmatprep.mubr.f32.mxu0 0.0
    %807 = vmatmul.mubr.f32.gmra.mxu0 %v733
    %v808 = vpop.f32.mrf.mxu0
    %v809 = vadd.f32 0.0, %v808
    %v810 = vpop.f32.mrf.mxu0
    %v811 = vadd.f32 0.0, %v810
    %812 = vdwg.mxu0
    %813 = vmatprep.subr.mxu0 %v554
    %814 = vmatpush1.msra.mxu0 %v553
    %815 = vmatprep.subr.mxu0 %v550
    %816 = vmatpush1.msra.mxu0 %v549
    %817 = vmatprep.subr.mxu0 %v546
    %818 = vmatpush1.msra.mxu0 %v545
    %819 = vmatprep.subr.mxu0 %v542
    %820 = vmatpush1.msra.mxu0 %v541
    %821 = vmatprep.subr.mxu0 %v538
    %822 = vmatpush1.msra.mxu0 %v537
    %823 = vmatprep.subr.mxu0 %v534
    %824 = vmatpush1.msra.mxu0 %v533
    %825 = vmatprep.subr.mxu0 %v530
    %826 = vmatpush1.msra.mxu0 %v529
    %827 = vmatprep.subr.mxu0 %v526
    %828 = vmatpush1.msra.mxu0 %v525
    %829 = vmatprep.subr.mxu0 %v522
    %830 = vmatpush1.msra.mxu0 %v521
    %831 = vmatprep.subr.mxu0 %v518
    %832 = vmatpush1.msra.mxu0 %v517
    %833 = vmatprep.subr.mxu0 %v514
    %834 = vmatpush1.msra.mxu0 %v513
    %835 = vmatprep.subr.mxu0 %v510
    %836 = vmatpush1.msra.mxu0 %v509
    %837 = vmatprep.subr.mxu0 %v506
    %838 = vmatpush1.msra.mxu0 %v505
    %839 = vmatprep.subr.mxu0 %v502
    %840 = vmatpush1.msra.mxu0 %v501
    %841 = vmatprep.subr.mxu0 %v498
    %842 = vmatpush1.msra.mxu0 %v497
    %843 = vmatprep.subr.mxu0 %v494
    %844 = vmatpush1.msra.mxu0 %v493
    %845 = vmatprep.subr.mxu0 0.0
    %846 = vmatpush2.msra.mxu0 0.0
    %847 = vmatprep.subr.mxu0 0.0
    %848 = vmatpush2.msra.mxu0 0.0
    %849 = vmatprep.subr.mxu0 0.0
    %850 = vmatpush2.msra.mxu0 0.0
    %851 = vmatprep.subr.mxu0 0.0
    %852 = vmatpush2.msra.mxu0 0.0
    %853 = vmatprep.subr.mxu0 0.0
    %854 = vmatpush2.msra.mxu0 0.0
    %855 = vmatprep.subr.mxu0 0.0
    %856 = vmatpush2.msra.mxu0 0.0
    %857 = vmatprep.subr.mxu0 0.0
    %858 = vmatpush2.msra.mxu0 0.0
    %859 = vmatprep.subr.mxu0 0.0
    %860 = vmatpush2.msra.mxu0 0.0
    %861 = vmatprep.subr.mxu0 0.0
    %862 = vmatpush2.msra.mxu0 0.0
    %863 = vmatprep.subr.mxu0 0.0
    %864 = vmatpush2.msra.mxu0 0.0
    %865 = vmatprep.subr.mxu0 0.0
    %866 = vmatpush2.msra.mxu0 0.0
    %867 = vmatprep.subr.mxu0 0.0
    %868 = vmatpush2.msra.mxu0 0.0
    %869 = vmatprep.subr.mxu0 0.0
    %870 = vmatpush2.msra.mxu0 0.0
    %871 = vmatprep.subr.mxu0 0.0
    %872 = vmatpush2.msra.mxu0 0.0
    %873 = vmatprep.subr.mxu0 0.0
    %874 = vmatpush2.msra.mxu0 0.0
    %875 = vmatprep.subr.mxu0 0.0
    %876 = vmatpush2.msra.mxu0 0.0
    %877 = vmatprep.mubr.f32.mxu0 0.0
    %878 = vmatmul.mubr.f32.gmra.mxu0 %v733
    %v879 = vpop.f32.mrf.mxu0
    %v880 = vadd.f32 0.0, %v879
    %v881 = vpop.f32.mrf.mxu0
    %v882 = vadd.f32 0.0, %v881
    %883 = vdwg.mxu0
    %v884 = vadd.f32 %v738, %v809
    %v885 = vadd.f32 %v739, %v811
    %v886 = vadd.f32 %v740, %v880
    %v887 = vadd.f32 %v741, %v882
    %v888 = vxor.u32 %v884, 2147483648
    %v889 = vxor.u32 %v885, 2147483648
    %v890 = vxor.u32 %v886, 2147483648
    %v891 = vmul.f32 %v888, 1.442695
    %v892 = vpow.pop %v891
    %v893 = vmul.f32 %v889, 1.442695
    %v894 = vpow.pop %v893
    %v895 = vmul.f32 %v890, 1.442695
    %v896 = vpow.pop %v895
    %v897 = vadd.f32 %v892, 1.0
    %v898 = vadd.f32 %v894, 1.0
    %v899 = vadd.f32 %v896, 1.0
    %v900 = vrcp.pop %v897
    %v901 = vmul.f32 1.0, %v900
    %v902 = vrcp.pop %v898
    %v903 = vmul.f32 1.0, %v902
    %v904 = vrcp.pop %v899
    %v905 = vmul.f32 1.0, %v904
    %v906 = vtanh.pop %v887
    %v907 = vmul.f32 %v903, %v731
    %v908 = vmul.f32 %v901, %v906
    %v909 = vadd.f32 %v907, %v908
    %v910 = vtanh.pop %v909
    %v911 = vmul.f32 %v905, %v910
    %s912 = scalar_lea.vmem [#allocation5], 8
    %913 = vst [vmem:[%s912] sm:$0xff] %v911
    %s914 = smul.u32 2, 4
    %s915 = smul.addr %s914, 8
    %s916 = scalar_lea.vmem [#allocation4], %s915
    %v917 = vld [vmem:[%s916] sm:$0xff]
    %v918 = vld [vmem:[%s916 + $0x8] sm:$0xff]
    %v919 = vld [vmem:[%s916 + $0x10] sm:$0xff]
    %v920 = vld [vmem:[%s916 + $0x18] sm:$0xff]
    %921 = vmatprep.subr.mxu0 %v552
    %922 = vmatpush1.msra.mxu0 %v551
    %923 = vmatprep.subr.mxu0 %v548
    %924 = vmatpush1.msra.mxu0 %v547
    %925 = vmatprep.subr.mxu0 %v544
    %926 = vmatpush1.msra.mxu0 %v543
    %927 = vmatprep.subr.mxu0 %v540
    %928 = vmatpush1.msra.mxu0 %v539
    %929 = vmatprep.subr.mxu0 %v536
    %930 = vmatpush1.msra.mxu0 %v535
    %931 = vmatprep.subr.mxu0 %v532
    %932 = vmatpush1.msra.mxu0 %v531
    %933 = vmatprep.subr.mxu0 %v528
    %934 = vmatpush1.msra.mxu0 %v527
    %935 = vmatprep.subr.mxu0 %v524
    %936 = vmatpush1.msra.mxu0 %v523
    %937 = vmatprep.subr.mxu0 %v520
    %938 = vmatpush1.msra.mxu0 %v519
    %939 = vmatprep.subr.mxu0 %v516
    %940 = vmatpush1.msra.mxu0 %v515
    %941 = vmatprep.subr.mxu0 %v512
    %942 = vmatpush1.msra.mxu0 %v511
    %943 = vmatprep.subr.mxu0 %v508
    %944 = vmatpush1.msra.mxu0 %v507
    %945 = vmatprep.subr.mxu0 %v504
    %946 = vmatpush1.msra.mxu0 %v503
    %947 = vmatprep.subr.mxu0 %v500
    %948 = vmatpush1.msra.mxu0 %v499
    %949 = vmatprep.subr.mxu0 %v496
    %950 = vmatpush1.msra.mxu0 %v495
    %951 = vmatprep.subr.mxu0 %v492
    %952 = vmatpush1.msra.mxu0 %v491
    %953 = vmatprep.subr.mxu0 0.0
    %954 = vmatpush2.msra.mxu0 0.0
    %955 = vmatprep.subr.mxu0 0.0
    %956 = vmatpush2.msra.mxu0 0.0
    %957 = vmatprep.subr.mxu0 0.0
    %958 = vmatpush2.msra.mxu0 0.0
    %959 = vmatprep.subr.mxu0 0.0
    %960 = vmatpush2.msra.mxu0 0.0
    %961 = vmatprep.subr.mxu0 0.0
    %962 = vmatpush2.msra.mxu0 0.0
    %963 = vmatprep.subr.mxu0 0.0
    %964 = vmatpush2.msra.mxu0 0.0
    %965 = vmatprep.subr.mxu0 0.0
    %966 = vmatpush2.msra.mxu0 0.0
    %967 = vmatprep.subr.mxu0 0.0
    %968 = vmatpush2.msra.mxu0 0.0
    %969 = vmatprep.subr.mxu0 0.0
    %970 = vmatpush2.msra.mxu0 0.0
    %971 = vmatprep.subr.mxu0 0.0
    %972 = vmatpush2.msra.mxu0 0.0
    %973 = vmatprep.subr.mxu0 0.0
    %974 = vmatpush2.msra.mxu0 0.0
    %975 = vmatprep.subr.mxu0 0.0
    %976 = vmatpush2.msra.mxu0 0.0
    %977 = vmatprep.subr.mxu0 0.0
    %978 = vmatpush2.msra.mxu0 0.0
    %979 = vmatprep.subr.mxu0 0.0
    %980 = vmatpush2.msra.mxu0 0.0
    %981 = vmatprep.subr.mxu0 0.0
    %982 = vmatpush2.msra.mxu0 0.0
    %983 = vmatprep.subr.mxu0 0.0
    %984 = vmatpush2.msra.mxu0 0.0
    %985 = vmatprep.mubr.f32.mxu0 0.0
    %986 = vmatmul.mubr.f32.gmra.mxu0 %v911
    %v987 = vpop.f32.mrf.mxu0
    %v988 = vadd.f32 0.0, %v987
    %v989 = vpop.f32.mrf.mxu0
    %v990 = vadd.f32 0.0, %v989
    %991 = vdwg.mxu0
    %992 = vmatprep.subr.mxu0 %v554
    %993 = vmatpush1.msra.mxu0 %v553
    %994 = vmatprep.subr.mxu0 %v550
    %995 = vmatpush1.msra.mxu0 %v549
    %996 = vmatprep.subr.mxu0 %v546
    %997 = vmatpush1.msra.mxu0 %v545
    %998 = vmatprep.subr.mxu0 %v542
    %999 = vmatpush1.msra.mxu0 %v541
    %1000 = vmatprep.subr.mxu0 %v538
    %1001 = vmatpush1.msra.mxu0 %v537
    %1002 = vmatprep.subr.mxu0 %v534
    %1003 = vmatpush1.msra.mxu0 %v533
    %1004 = vmatprep.subr.mxu0 %v530
    %1005 = vmatpush1.msra.mxu0 %v529
    %1006 = vmatprep.subr.mxu0 %v526
    %1007 = vmatpush1.msra.mxu0 %v525
    %1008 = vmatprep.subr.mxu0 %v522
    %1009 = vmatpush1.msra.mxu0 %v521
    %1010 = vmatprep.subr.mxu0 %v518
    %1011 = vmatpush1.msra.mxu0 %v517
    %1012 = vmatprep.subr.mxu0 %v514
    %1013 = vmatpush1.msra.mxu0 %v513
    %1014 = vmatprep.subr.mxu0 %v510
    %1015 = vmatpush1.msra.mxu0 %v509
    %1016 = vmatprep.subr.mxu0 %v506
    %1017 = vmatpush1.msra.mxu0 %v505
    %1018 = vmatprep.subr.mxu0 %v502
    %1019 = vmatpush1.msra.mxu0 %v501
    %1020 = vmatprep.subr.mxu0 %v498
    %1021 = vmatpush1.msra.mxu0 %v497
    %1022 = vmatprep.subr.mxu0 %v494
    %1023 = vmatpush1.msra.mxu0 %v493
    %1024 = vmatprep.subr.mxu0 0.0
    %1025 = vmatpush2.msra.mxu0 0.0
    %1026 = vmatprep.subr.mxu0 0.0
    %1027 = vmatpush2.msra.mxu0 0.0
    %1028 = vmatprep.subr.mxu0 0.0
    %1029 = vmatpush2.msra.mxu0 0.0
    %1030 = vmatprep.subr.mxu0 0.0
    %1031 = vmatpush2.msra.mxu0 0.0
    %1032 = vmatprep.subr.mxu0 0.0
    %1033 = vmatpush2.msra.mxu0 0.0
    %1034 = vmatprep.subr.mxu0 0.0
    %1035 = vmatpush2.msra.mxu0 0.0
    %1036 = vmatprep.subr.mxu0 0.0
    %1037 = vmatpush2.msra.mxu0 0.0
    %1038 = vmatprep.subr.mxu0 0.0
    %1039 = vmatpush2.msra.mxu0 0.0
    %1040 = vmatprep.subr.mxu0 0.0
    %1041 = vmatpush2.msra.mxu0 0.0
    %1042 = vmatprep.subr.mxu0 0.0
    %1043 = vmatpush2.msra.mxu0 0.0
    %1044 = vmatprep.subr.mxu0 0.0
    %1045 = vmatpush2.msra.mxu0 0.0
    %1046 = vmatprep.subr.mxu0 0.0
    %1047 = vmatpush2.msra.mxu0 0.0
    %1048 = vmatprep.subr.mxu0 0.0
    %1049 = vmatpush2.msra.mxu0 0.0
    %1050 = vmatprep.subr.mxu0 0.0
    %1051 = vmatpush2.msra.mxu0 0.0
    %1052 = vmatprep.subr.mxu0 0.0
    %1053 = vmatpush2.msra.mxu0 0.0
    %1054 = vmatprep.subr.mxu0 0.0
    %1055 = vmatpush2.msra.mxu0 0.0
    %1056 = vmatprep.mubr.f32.mxu0 0.0
    %1057 = vmatmul.mubr.f32.gmra.mxu0 %v911
    %v1058 = vpop.f32.mrf.mxu0
    %v1059 = vadd.f32 0.0, %v1058
    %v1060 = vpop.f32.mrf.mxu0
    %v1061 = vadd.f32 0.0, %v1060
    %1062 = vdwg.mxu0
    %v1063 = vadd.f32 %v917, %v988
    %v1064 = vadd.f32 %v918, %v990
    %v1065 = vadd.f32 %v919, %v1059
    %v1066 = vadd.f32 %v920, %v1061
    %v1067 = vxor.u32 %v1063, 2147483648
    %v1068 = vxor.u32 %v1064, 2147483648
    %v1069 = vxor.u32 %v1065, 2147483648
    %v1070 = vmul.f32 %v1067, 1.442695
    %v1071 = vpow.pop %v1070
    %v1072 = vmul.f32 %v1068, 1.442695
    %v1073 = vpow.pop %v1072
    %v1074 = vmul.f32 %v1069, 1.442695
    %v1075 = vpow.pop %v1074
    %v1076 = vadd.f32 %v1071, 1.0
    %v1077 = vadd.f32 %v1073, 1.0
    %v1078 = vadd.f32 %v1075, 1.0
    %v1079 = vrcp.pop %v1076
    %v1080 = vmul.f32 1.0, %v1079
    %v1081 = vrcp.pop %v1077
    %v1082 = vmul.f32 1.0, %v1081
    %v1083 = vrcp.pop %v1078
    %v1084 = vmul.f32 1.0, %v1083
    %v1085 = vtanh.pop %v1066
    %v1086 = vmul.f32 %v1082, %v909
    %v1087 = vmul.f32 %v1080, %v1085
    %v1088 = vadd.f32 %v1086, %v1087
    %v1089 = vtanh.pop %v1088
    %v1090 = vmul.f32 %v1084, %v1089
    %s1091 = scalar_lea.vmem [#allocation5], 16
    %1092 = vst [vmem:[%s1091] sm:$0xff] %v1090
    %s1093 = smul.u32 3, 4
    %s1094 = smul.addr %s1093, 8
    %s1095 = scalar_lea.vmem [#allocation4], %s1094
    %v1096 = vld [vmem:[%s1095] sm:$0xff]
    %v1097 = vld [vmem:[%s1095 + $0x8] sm:$0xff]
    %v1098 = vld [vmem:[%s1095 + $0x10] sm:$0xff]
    %v1099 = vld [vmem:[%s1095 + $0x18] sm:$0xff]
    %1100 = vmatprep.subr.mxu0 %v552
    %1101 = vmatpush1.msra.mxu0 %v551
    %1102 = vmatprep.subr.mxu0 %v548
    %1103 = vmatpush1.msra.mxu0 %v547
    %1104 = vmatprep.subr.mxu0 %v544
    %1105 = vmatpush1.msra.mxu0 %v543
    %1106 = vmatprep.subr.mxu0 %v540
    %1107 = vmatpush1.msra.mxu0 %v539
    %1108 = vmatprep.subr.mxu0 %v536
    %1109 = vmatpush1.msra.mxu0 %v535
    %1110 = vmatprep.subr.mxu0 %v532
    %1111 = vmatpush1.msra.mxu0 %v531
    %1112 = vmatprep.subr.mxu0 %v528
    %1113 = vmatpush1.msra.mxu0 %v527
    %1114 = vmatprep.subr.mxu0 %v524
    %1115 = vmatpush1.msra.mxu0 %v523
    %1116 = vmatprep.subr.mxu0 %v520
    %1117 = vmatpush1.msra.mxu0 %v519
    %1118 = vmatprep.subr.mxu0 %v516
    %1119 = vmatpush1.msra.mxu0 %v515
    %1120 = vmatprep.subr.mxu0 %v512
    %1121 = vmatpush1.msra.mxu0 %v511
    %1122 = vmatprep.subr.mxu0 %v508
    %1123 = vmatpush1.msra.mxu0 %v507
    %1124 = vmatprep.subr.mxu0 %v504
    %1125 = vmatpush1.msra.mxu0 %v503
    %1126 = vmatprep.subr.mxu0 %v500
    %1127 = vmatpush1.msra.mxu0 %v499
    %1128 = vmatprep.subr.mxu0 %v496
    %1129 = vmatpush1.msra.mxu0 %v495
    %1130 = vmatprep.subr.mxu0 %v492
    %1131 = vmatpush1.msra.mxu0 %v491
    %1132 = vmatprep.subr.mxu0 0.0
    %1133 = vmatpush2.msra.mxu0 0.0
    %1134 = vmatprep.subr.mxu0 0.0
    %1135 = vmatpush2.msra.mxu0 0.0
    %1136 = vmatprep.subr.mxu0 0.0
    %1137 = vmatpush2.msra.mxu0 0.0
    %1138 = vmatprep.subr.mxu0 0.0
    %1139 = vmatpush2.msra.mxu0 0.0
    %1140 = vmatprep.subr.mxu0 0.0
    %1141 = vmatpush2.msra.mxu0 0.0
    %1142 = vmatprep.subr.mxu0 0.0
    %1143 = vmatpush2.msra.mxu0 0.0
    %1144 = vmatprep.subr.mxu0 0.0
    %1145 = vmatpush2.msra.mxu0 0.0
    %1146 = vmatprep.subr.mxu0 0.0
    %1147 = vmatpush2.msra.mxu0 0.0
    %1148 = vmatprep.subr.mxu0 0.0
    %1149 = vmatpush2.msra.mxu0 0.0
    %1150 = vmatprep.subr.mxu0 0.0
    %1151 = vmatpush2.msra.mxu0 0.0
    %1152 = vmatprep.subr.mxu0 0.0
    %1153 = vmatpush2.msra.mxu0 0.0
    %1154 = vmatprep.subr.mxu0 0.0
    %1155 = vmatpush2.msra.mxu0 0.0
    %1156 = vmatprep.subr.mxu0 0.0
    %1157 = vmatpush2.msra.mxu0 0.0
    %1158 = vmatprep.subr.mxu0 0.0
    %1159 = vmatpush2.msra.mxu0 0.0
    %1160 = vmatprep.subr.mxu0 0.0
    %1161 = vmatpush2.msra.mxu0 0.0
    %1162 = vmatprep.subr.mxu0 0.0
    %1163 = vmatpush2.msra.mxu0 0.0
    %1164 = vmatprep.mubr.f32.mxu0 0.0
    %1165 = vmatmul.mubr.f32.gmra.mxu0 %v1090
    %v1166 = vpop.f32.mrf.mxu0
    %v1167 = vadd.f32 0.0, %v1166
    %v1168 = vpop.f32.mrf.mxu0
    %v1169 = vadd.f32 0.0, %v1168
    %1170 = vdwg.mxu0
    %1171 = vmatprep.subr.mxu0 %v554
    %1172 = vmatpush1.msra.mxu0 %v553
    %1173 = vmatprep.subr.mxu0 %v550
    %1174 = vmatpush1.msra.mxu0 %v549
    %1175 = vmatprep.subr.mxu0 %v546
    %1176 = vmatpush1.msra.mxu0 %v545
    %1177 = vmatprep.subr.mxu0 %v542
    %1178 = vmatpush1.msra.mxu0 %v541
    %1179 = vmatprep.subr.mxu0 %v538
    %1180 = vmatpush1.msra.mxu0 %v537
    %1181 = vmatprep.subr.mxu0 %v534
    %1182 = vmatpush1.msra.mxu0 %v533
    %1183 = vmatprep.subr.mxu0 %v530
    %1184 = vmatpush1.msra.mxu0 %v529
    %1185 = vmatprep.subr.mxu0 %v526
    %1186 = vmatpush1.msra.mxu0 %v525
    %1187 = vmatprep.subr.mxu0 %v522
    %1188 = vmatpush1.msra.mxu0 %v521
    %1189 = vmatprep.subr.mxu0 %v518
    %1190 = vmatpush1.msra.mxu0 %v517
    %1191 = vmatprep.subr.mxu0 %v514
    %1192 = vmatpush1.msra.mxu0 %v513
    %1193 = vmatprep.subr.mxu0 %v510
    %1194 = vmatpush1.msra.mxu0 %v509
    %1195 = vmatprep.subr.mxu0 %v506
    %1196 = vmatpush1.msra.mxu0 %v505
    %1197 = vmatprep.subr.mxu0 %v502
    %1198 = vmatpush1.msra.mxu0 %v501
    %1199 = vmatprep.subr.mxu0 %v498
    %1200 = vmatpush1.msra.mxu0 %v497
    %1201 = vmatprep.subr.mxu0 %v494
    %1202 = vmatpush1.msra.mxu0 %v493
    %1203 = vmatprep.subr.mxu0 0.0
    %1204 = vmatpush2.msra.mxu0 0.0
    %1205 = vmatprep.subr.mxu0 0.0
    %1206 = vmatpush2.msra.mxu0 0.0
    %1207 = vmatprep.subr.mxu0 0.0
    %1208 = vmatpush2.msra.mxu0 0.0
    %1209 = vmatprep.subr.mxu0 0.0
    %1210 = vmatpush2.msra.mxu0 0.0
    %1211 = vmatprep.subr.mxu0 0.0
    %1212 = vmatpush2.msra.mxu0 0.0
    %1213 = vmatprep.subr.mxu0 0.0
    %1214 = vmatpush2.msra.mxu0 0.0
    %1215 = vmatprep.subr.mxu0 0.0
    %1216 = vmatpush2.msra.mxu0 0.0
    %1217 = vmatprep.subr.mxu0 0.0
    %1218 = vmatpush2.msra.mxu0 0.0
    %1219 = vmatprep.subr.mxu0 0.0
    %1220 = vmatpush2.msra.mxu0 0.0
    %1221 = vmatprep.subr.mxu0 0.0
    %1222 = vmatpush2.msra.mxu0 0.0
    %1223 = vmatprep.subr.mxu0 0.0
    %1224 = vmatpush2.msra.mxu0 0.0
    %1225 = vmatprep.subr.mxu0 0.0
    %1226 = vmatpush2.msra.mxu0 0.0
    %1227 = vmatprep.subr.mxu0 0.0
    %1228 = vmatpush2.msra.mxu0 0.0
    %1229 = vmatprep.subr.mxu0 0.0
    %1230 = vmatpush2.msra.mxu0 0.0
    %1231 = vmatprep.subr.mxu0 0.0
    %1232 = vmatpush2.msra.mxu0 0.0
    %1233 = vmatprep.subr.mxu0 0.0
    %1234 = vmatpush2.msra.mxu0 0.0
    %1235 = vmatprep.mubr.f32.mxu0 0.0
    %1236 = vmatmul.mubr.f32.gmra.mxu0 %v1090
    %v1237 = vpop.f32.mrf.mxu0
    %v1238 = vadd.f32 0.0, %v1237
    %v1239 = vpop.f32.mrf.mxu0
    %v1240 = vadd.f32 0.0, %v1239
    %1241 = vdwg.mxu0
    %v1242 = vadd.f32 %v1096, %v1167
    %v1243 = vadd.f32 %v1097, %v1169
    %v1244 = vadd.f32 %v1098, %v1238
    %v1245 = vadd.f32 %v1099, %v1240
    %v1246 = vxor.u32 %v1242, 2147483648
    %v1247 = vxor.u32 %v1243, 2147483648
    %v1248 = vxor.u32 %v1244, 2147483648
    %v1249 = vmul.f32 %v1246, 1.442695
    %v1250 = vpow.pop %v1249
    %v1251 = vmul.f32 %v1247, 1.442695
    %v1252 = vpow.pop %v1251
    %v1253 = vmul.f32 %v1248, 1.442695
    %v1254 = vpow.pop %v1253
    %v1255 = vadd.f32 %v1250, 1.0
    %v1256 = vadd.f32 %v1252, 1.0
    %v1257 = vadd.f32 %v1254, 1.0
    %v1258 = vrcp.pop %v1255
    %v1259 = vmul.f32 1.0, %v1258
    %v1260 = vrcp.pop %v1256
    %v1261 = vmul.f32 1.0, %v1260
    %v1262 = vrcp.pop %v1257
    %v1263 = vmul.f32 1.0, %v1262
    %v1264 = vtanh.pop %v1245
    %v1265 = vmul.f32 %v1261, %v1088
    %v1266 = vmul.f32 %v1259, %v1264
    %v1267 = vadd.f32 %v1265, %v1266
    %v1268 = vtanh.pop %v1267
    %v1269 = vmul.f32 %v1263, %v1268
    %s1270 = scalar_lea.vmem [#allocation5], 24
    %1271 = vst [vmem:[%s1270] sm:$0xff] %v1269
    %s1272 = smul.u32 4, 4
    %s1273 = smul.addr %s1272, 8
    %s1274 = scalar_lea.vmem [#allocation4], %s1273
    %v1275 = vld [vmem:[%s1274] sm:$0xff]
    %v1276 = vld [vmem:[%s1274 + $0x8] sm:$0xff]
    %v1277 = vld [vmem:[%s1274 + $0x10] sm:$0xff]
    %v1278 = vld [vmem:[%s1274 + $0x18] sm:$0xff]
    %1279 = vmatprep.subr.mxu0 %v552
    %1280 = vmatpush1.msra.mxu0 %v551
    %1281 = vmatprep.subr.mxu0 %v548
    %1282 = vmatpush1.msra.mxu0 %v547
    %1283 = vmatprep.subr.mxu0 %v544
    %1284 = vmatpush1.msra.mxu0 %v543
    %1285 = vmatprep.subr.mxu0 %v540
    %1286 = vmatpush1.msra.mxu0 %v539
    %1287 = vmatprep.subr.mxu0 %v536
    %1288 = vmatpush1.msra.mxu0 %v535
    %1289 = vmatprep.subr.mxu0 %v532
    %1290 = vmatpush1.msra.mxu0 %v531
    %1291 = vmatprep.subr.mxu0 %v528
    %1292 = vmatpush1.msra.mxu0 %v527
    %1293 = vmatprep.subr.mxu0 %v524
    %1294 = vmatpush1.msra.mxu0 %v523
    %1295 = vmatprep.subr.mxu0 %v520
    %1296 = vmatpush1.msra.mxu0 %v519
    %1297 = vmatprep.subr.mxu0 %v516
    %1298 = vmatpush1.msra.mxu0 %v515
    %1299 = vmatprep.subr.mxu0 %v512
    %1300 = vmatpush1.msra.mxu0 %v511
    %1301 = vmatprep.subr.mxu0 %v508
    %1302 = vmatpush1.msra.mxu0 %v507
    %1303 = vmatprep.subr.mxu0 %v504
    %1304 = vmatpush1.msra.mxu0 %v503
    %1305 = vmatprep.subr.mxu0 %v500
    %1306 = vmatpush1.msra.mxu0 %v499
    %1307 = vmatprep.subr.mxu0 %v496
    %1308 = vmatpush1.msra.mxu0 %v495
    %1309 = vmatprep.subr.mxu0 %v492
    %1310 = vmatpush1.msra.mxu0 %v491
    %1311 = vmatprep.subr.mxu0 0.0
    %1312 = vmatpush2.msra.mxu0 0.0
    %1313 = vmatprep.subr.mxu0 0.0
    %1314 = vmatpush2.msra.mxu0 0.0
    %1315 = vmatprep.subr.mxu0 0.0
    %1316 = vmatpush2.msra.mxu0 0.0
    %1317 = vmatprep.subr.mxu0 0.0
    %1318 = vmatpush2.msra.mxu0 0.0
    %1319 = vmatprep.subr.mxu0 0.0
    %1320 = vmatpush2.msra.mxu0 0.0
    %1321 = vmatprep.subr.mxu0 0.0
    %1322 = vmatpush2.msra.mxu0 0.0
    %1323 = vmatprep.subr.mxu0 0.0
    %1324 = vmatpush2.msra.mxu0 0.0
    %1325 = vmatprep.subr.mxu0 0.0
    %1326 = vmatpush2.msra.mxu0 0.0
    %1327 = vmatprep.subr.mxu0 0.0
    %1328 = vmatpush2.msra.mxu0 0.0
    %1329 = vmatprep.subr.mxu0 0.0
    %1330 = vmatpush2.msra.mxu0 0.0
    %1331 = vmatprep.subr.mxu0 0.0
    %1332 = vmatpush2.msra.mxu0 0.0
    %1333 = vmatprep.subr.mxu0 0.0
    %1334 = vmatpush2.msra.mxu0 0.0
    %1335 = vmatprep.subr.mxu0 0.0
    %1336 = vmatpush2.msra.mxu0 0.0
    %1337 = vmatprep.subr.mxu0 0.0
    %1338 = vmatpush2.msra.mxu0 0.0
    %1339 = vmatprep.subr.mxu0 0.0
    %1340 = vmatpush2.msra.mxu0 0.0
    %1341 = vmatprep.subr.mxu0 0.0
    %1342 = vmatpush2.msra.mxu0 0.0
    %1343 = vmatprep.mubr.f32.mxu0 0.0
    %1344 = vmatmul.mubr.f32.gmra.mxu0 %v1269
    %v1345 = vpop.f32.mrf.mxu0
    %v1346 = vadd.f32 0.0, %v1345
    %v1347 = vpop.f32.mrf.mxu0
    %v1348 = vadd.f32 0.0, %v1347
    %1349 = vdwg.mxu0
    %1350 = vmatprep.subr.mxu0 %v554
    %1351 = vmatpush1.msra.mxu0 %v553
    %1352 = vmatprep.subr.mxu0 %v550
    %1353 = vmatpush1.msra.mxu0 %v549
    %1354 = vmatprep.subr.mxu0 %v546
    %1355 = vmatpush1.msra.mxu0 %v545
    %1356 = vmatprep.subr.mxu0 %v542
    %1357 = vmatpush1.msra.mxu0 %v541
    %1358 = vmatprep.subr.mxu0 %v538
    %1359 = vmatpush1.msra.mxu0 %v537
    %1360 = vmatprep.subr.mxu0 %v534
    %1361 = vmatpush1.msra.mxu0 %v533
    %1362 = vmatprep.subr.mxu0 %v530
    %1363 = vmatpush1.msra.mxu0 %v529
    %1364 = vmatprep.subr.mxu0 %v526
    %1365 = vmatpush1.msra.mxu0 %v525
    %1366 = vmatprep.subr.mxu0 %v522
    %1367 = vmatpush1.msra.mxu0 %v521
    %1368 = vmatprep.subr.mxu0 %v518
    %1369 = vmatpush1.msra.mxu0 %v517
    %1370 = vmatprep.subr.mxu0 %v514
    %1371 = vmatpush1.msra.mxu0 %v513
    %1372 = vmatprep.subr.mxu0 %v510
    %1373 = vmatpush1.msra.mxu0 %v509
    %1374 = vmatprep.subr.mxu0 %v506
    %1375 = vmatpush1.msra.mxu0 %v505
    %1376 = vmatprep.subr.mxu0 %v502
    %1377 = vmatpush1.msra.mxu0 %v501
    %1378 = vmatprep.subr.mxu0 %v498
    %1379 = vmatpush1.msra.mxu0 %v497
    %1380 = vmatprep.subr.mxu0 %v494
    %1381 = vmatpush1.msra.mxu0 %v493
    %1382 = vmatprep.subr.mxu0 0.0
    %1383 = vmatpush2.msra.mxu0 0.0
    %1384 = vmatprep.subr.mxu0 0.0
    %1385 = vmatpush2.msra.mxu0 0.0
    %1386 = vmatprep.subr.mxu0 0.0
    %1387 = vmatpush2.msra.mxu0 0.0
    %1388 = vmatprep.subr.mxu0 0.0
    %1389 = vmatpush2.msra.mxu0 0.0
    %1390 = vmatprep.subr.mxu0 0.0
    %1391 = vmatpush2.msra.mxu0 0.0
    %1392 = vmatprep.subr.mxu0 0.0
    %1393 = vmatpush2.msra.mxu0 0.0
    %1394 = vmatprep.subr.mxu0 0.0
    %1395 = vmatpush2.msra.mxu0 0.0
    %1396 = vmatprep.subr.mxu0 0.0
    %1397 = vmatpush2.msra.mxu0 0.0
    %1398 = vmatprep.subr.mxu0 0.0
    %1399 = vmatpush2.msra.mxu0 0.0
    %1400 = vmatprep.subr.mxu0 0.0
    %1401 = vmatpush2.msra.mxu0 0.0
    %1402 = vmatprep.subr.mxu0 0.0
    %1403 = vmatpush2.msra.mxu0 0.0
    %1404 = vmatprep.subr.mxu0 0.0
    %1405 = vmatpush2.msra.mxu0 0.0
    %1406 = vmatprep.subr.mxu0 0.0
    %1407 = vmatpush2.msra.mxu0 0.0
    %1408 = vmatprep.subr.mxu0 0.0
    %1409 = vmatpush2.msra.mxu0 0.0
    %1410 = vmatprep.subr.mxu0 0.0
    %1411 = vmatpush2.msra.mxu0 0.0
    %1412 = vmatprep.subr.mxu0 0.0
    %1413 = vmatpush2.msra.mxu0 0.0
    %1414 = vmatprep.mubr.f32.mxu0 0.0
    %1415 = vmatmul.mubr.f32.gmra.mxu0 %v1269
    %v1416 = vpop.f32.mrf.mxu0
    %v1417 = vadd.f32 0.0, %v1416
    %v1418 = vpop.f32.mrf.mxu0
    %v1419 = vadd.f32 0.0, %v1418
    %1420 = vdwg.mxu0
    %v1421 = vadd.f32 %v1275, %v1346
    %v1422 = vadd.f32 %v1276, %v1348
    %v1423 = vadd.f32 %v1277, %v1417
    %v1424 = vadd.f32 %v1278, %v1419
    %v1425 = vxor.u32 %v1421, 2147483648
    %v1426 = vxor.u32 %v1422, 2147483648
    %v1427 = vxor.u32 %v1423, 2147483648
    %v1428 = vmul.f32 %v1425, 1.442695
    %v1429 = vpow.pop %v1428
    %v1430 = vmul.f32 %v1426, 1.442695
    %v1431 = vpow.pop %v1430
    %v1432 = vmul.f32 %v1427, 1.442695
    %v1433 = vpow.pop %v1432
    %v1434 = vadd.f32 %v1429, 1.0
    %v1435 = vadd.f32 %v1431, 1.0
    %v1436 = vadd.f32 %v1433, 1.0
    %v1437 = vrcp.pop %v1434
    %v1438 = vmul.f32 1.0, %v1437
    %v1439 = vrcp.pop %v1435
    %v1440 = vmul.f32 1.0, %v1439
    %v1441 = vrcp.pop %v1436
    %v1442 = vmul.f32 1.0, %v1441
    %v1443 = vtanh.pop %v1424
    %v1444 = vmul.f32 %v1440, %v1267
    %v1445 = vmul.f32 %v1438, %v1443
    %v1446 = vadd.f32 %v1444, %v1445
    %v1447 = vtanh.pop %v1446
    %v1448 = vmul.f32 %v1442, %v1447
    %s1449 = scalar_lea.vmem [#allocation5], 32
    %1450 = vst [vmem:[%s1449] sm:$0xff] %v1448
    %s1451 = smul.u32 5, 4
    %s1452 = smul.addr %s1451, 8
    %s1453 = scalar_lea.vmem [#allocation4], %s1452
    %v1454 = vld [vmem:[%s1453] sm:$0xff]
    %v1455 = vld [vmem:[%s1453 + $0x8] sm:$0xff]
    %v1456 = vld [vmem:[%s1453 + $0x10] sm:$0xff]
    %v1457 = vld [vmem:[%s1453 + $0x18] sm:$0xff]
    %1458 = vmatprep.subr.mxu0 %v552
    %1459 = vmatpush1.msra.mxu0 %v551
    %1460 = vmatprep.subr.mxu0 %v548
    %1461 = vmatpush1.msra.mxu0 %v547
    %1462 = vmatprep.subr.mxu0 %v544
    %1463 = vmatpush1.msra.mxu0 %v543
    %1464 = vmatprep.subr.mxu0 %v540
    %1465 = vmatpush1.msra.mxu0 %v539
    %1466 = vmatprep.subr.mxu0 %v536
    %1467 = vmatpush1.msra.mxu0 %v535
    %1468 = vmatprep.subr.mxu0 %v532
    %1469 = vmatpush1.msra.mxu0 %v531
    %1470 = vmatprep.subr.mxu0 %v528
    %1471 = vmatpush1.msra.mxu0 %v527
    %1472 = vmatprep.subr.mxu0 %v524
    %1473 = vmatpush1.msra.mxu0 %v523
    %1474 = vmatprep.subr.mxu0 %v520
    %1475 = vmatpush1.msra.mxu0 %v519
    %1476 = vmatprep.subr.mxu0 %v516
    %1477 = vmatpush1.msra.mxu0 %v515
    %1478 = vmatprep.subr.mxu0 %v512
    %1479 = vmatpush1.msra.mxu0 %v511
    %1480 = vmatprep.subr.mxu0 %v508
    %1481 = vmatpush1.msra.mxu0 %v507
    %1482 = vmatprep.subr.mxu0 %v504
    %1483 = vmatpush1.msra.mxu0 %v503
    %1484 = vmatprep.subr.mxu0 %v500
    %1485 = vmatpush1.msra.mxu0 %v499
    %1486 = vmatprep.subr.mxu0 %v496
    %1487 = vmatpush1.msra.mxu0 %v495
    %1488 = vmatprep.subr.mxu0 %v492
    %1489 = vmatpush1.msra.mxu0 %v491
    %1490 = vmatprep.subr.mxu0 0.0
    %1491 = vmatpush2.msra.mxu0 0.0
    %1492 = vmatprep.subr.mxu0 0.0
    %1493 = vmatpush2.msra.mxu0 0.0
    %1494 = vmatprep.subr.mxu0 0.0
    %1495 = vmatpush2.msra.mxu0 0.0
    %1496 = vmatprep.subr.mxu0 0.0
    %1497 = vmatpush2.msra.mxu0 0.0
    %1498 = vmatprep.subr.mxu0 0.0
    %1499 = vmatpush2.msra.mxu0 0.0
    %1500 = vmatprep.subr.mxu0 0.0
    %1501 = vmatpush2.msra.mxu0 0.0
    %1502 = vmatprep.subr.mxu0 0.0
    %1503 = vmatpush2.msra.mxu0 0.0
    %1504 = vmatprep.subr.mxu0 0.0
    %1505 = vmatpush2.msra.mxu0 0.0
    %1506 = vmatprep.subr.mxu0 0.0
    %1507 = vmatpush2.msra.mxu0 0.0
    %1508 = vmatprep.subr.mxu0 0.0
    %1509 = vmatpush2.msra.mxu0 0.0
    %1510 = vmatprep.subr.mxu0 0.0
    %1511 = vmatpush2.msra.mxu0 0.0
    %1512 = vmatprep.subr.mxu0 0.0
    %1513 = vmatpush2.msra.mxu0 0.0
    %1514 = vmatprep.subr.mxu0 0.0
    %1515 = vmatpush2.msra.mxu0 0.0
    %1516 = vmatprep.subr.mxu0 0.0
    %1517 = vmatpush2.msra.mxu0 0.0
    %1518 = vmatprep.subr.mxu0 0.0
    %1519 = vmatpush2.msra.mxu0 0.0
    %1520 = vmatprep.subr.mxu0 0.0
    %1521 = vmatpush2.msra.mxu0 0.0
    %1522 = vmatprep.mubr.f32.mxu0 0.0
    %1523 = vmatmul.mubr.f32.gmra.mxu0 %v1448
    %v1524 = vpop.f32.mrf.mxu0
    %v1525 = vadd.f32 0.0, %v1524
    %v1526 = vpop.f32.mrf.mxu0
    %v1527 = vadd.f32 0.0, %v1526
    %1528 = vdwg.mxu0
    %1529 = vmatprep.subr.mxu0 %v554
    %1530 = vmatpush1.msra.mxu0 %v553
    %1531 = vmatprep.subr.mxu0 %v550
    %1532 = vmatpush1.msra.mxu0 %v549
    %1533 = vmatprep.subr.mxu0 %v546
    %1534 = vmatpush1.msra.mxu0 %v545
    %1535 = vmatprep.subr.mxu0 %v542
    %1536 = vmatpush1.msra.mxu0 %v541
    %1537 = vmatprep.subr.mxu0 %v538
    %1538 = vmatpush1.msra.mxu0 %v537
    %1539 = vmatprep.subr.mxu0 %v534
    %1540 = vmatpush1.msra.mxu0 %v533
    %1541 = vmatprep.subr.mxu0 %v530
    %1542 = vmatpush1.msra.mxu0 %v529
    %1543 = vmatprep.subr.mxu0 %v526
    %1544 = vmatpush1.msra.mxu0 %v525
    %1545 = vmatprep.subr.mxu0 %v522
    %1546 = vmatpush1.msra.mxu0 %v521
    %1547 = vmatprep.subr.mxu0 %v518
    %1548 = vmatpush1.msra.mxu0 %v517
    %1549 = vmatprep.subr.mxu0 %v514
    %1550 = vmatpush1.msra.mxu0 %v513
    %1551 = vmatprep.subr.mxu0 %v510
    %1552 = vmatpush1.msra.mxu0 %v509
    %1553 = vmatprep.subr.mxu0 %v506
    %1554 = vmatpush1.msra.mxu0 %v505
    %1555 = vmatprep.subr.mxu0 %v502
    %1556 = vmatpush1.msra.mxu0 %v501
    %1557 = vmatprep.subr.mxu0 %v498
    %1558 = vmatpush1.msra.mxu0 %v497
    %1559 = vmatprep.subr.mxu0 %v494
    %1560 = vmatpush1.msra.mxu0 %v493
    %1561 = vmatprep.subr.mxu0 0.0
    %1562 = vmatpush2.msra.mxu0 0.0
    %1563 = vmatprep.subr.mxu0 0.0
    %1564 = vmatpush2.msra.mxu0 0.0
    %1565 = vmatprep.subr.mxu0 0.0
    %1566 = vmatpush2.msra.mxu0 0.0
    %1567 = vmatprep.subr.mxu0 0.0
    %1568 = vmatpush2.msra.mxu0 0.0
    %1569 = vmatprep.subr.mxu0 0.0
    %1570 = vmatpush2.msra.mxu0 0.0
    %1571 = vmatprep.subr.mxu0 0.0
    %1572 = vmatpush2.msra.mxu0 0.0
    %1573 = vmatprep.subr.mxu0 0.0
    %1574 = vmatpush2.msra.mxu0 0.0
    %1575 = vmatprep.subr.mxu0 0.0
    %1576 = vmatpush2.msra.mxu0 0.0
    %1577 = vmatprep.subr.mxu0 0.0
    %1578 = vmatpush2.msra.mxu0 0.0
    %1579 = vmatprep.subr.mxu0 0.0
    %1580 = vmatpush2.msra.mxu0 0.0
    %1581 = vmatprep.subr.mxu0 0.0
    %1582 = vmatpush2.msra.mxu0 0.0
    %1583 = vmatprep.subr.mxu0 0.0
    %1584 = vmatpush2.msra.mxu0 0.0
    %1585 = vmatprep.subr.mxu0 0.0
    %1586 = vmatpush2.msra.mxu0 0.0
    %1587 = vmatprep.subr.mxu0 0.0
    %1588 = vmatpush2.msra.mxu0 0.0
    %1589 = vmatprep.subr.mxu0 0.0
    %1590 = vmatpush2.msra.mxu0 0.0
    %1591 = vmatprep.subr.mxu0 0.0
    %1592 = vmatpush2.msra.mxu0 0.0
    %1593 = vmatprep.mubr.f32.mxu0 0.0
    %1594 = vmatmul.mubr.f32.gmra.mxu0 %v1448
    %v1595 = vpop.f32.mrf.mxu0
    %v1596 = vadd.f32 0.0, %v1595
    %v1597 = vpop.f32.mrf.mxu0
    %v1598 = vadd.f32 0.0, %v1597
    %1599 = vdwg.mxu0
    %v1600 = vadd.f32 %v1454, %v1525
    %v1601 = vadd.f32 %v1455, %v1527
    %v1602 = vadd.f32 %v1456, %v1596
    %v1603 = vadd.f32 %v1457, %v1598
    %v1604 = vxor.u32 %v1600, 2147483648
    %v1605 = vxor.u32 %v1601, 2147483648
    %v1606 = vxor.u32 %v1602, 2147483648
    %v1607 = vmul.f32 %v1604, 1.442695
    %v1608 = vpow.pop %v1607
    %v1609 = vmul.f32 %v1605, 1.442695
    %v1610 = vpow.pop %v1609
    %v1611 = vmul.f32 %v1606, 1.442695
    %v1612 = vpow.pop %v1611
    %v1613 = vadd.f32 %v1608, 1.0
    %v1614 = vadd.f32 %v1610, 1.0
    %v1615 = vadd.f32 %v1612, 1.0
    %v1616 = vrcp.pop %v1613
    %v1617 = vmul.f32 1.0, %v1616
    %v1618 = vrcp.pop %v1614
    %v1619 = vmul.f32 1.0, %v1618
    %v1620 = vrcp.pop %v1615
    %v1621 = vmul.f32 1.0, %v1620
    %v1622 = vtanh.pop %v1603
    %v1623 = vmul.f32 %v1619, %v1446
    %v1624 = vmul.f32 %v1617, %v1622
    %v1625 = vadd.f32 %v1623, %v1624
    %v1626 = vtanh.pop %v1625
    %v1627 = vmul.f32 %v1621, %v1626
    %s1628 = scalar_lea.vmem [#allocation5], 40
    %1629 = vst [vmem:[%s1628] sm:$0xff] %v1627
    %s1630 = smul.u32 6, 4
    %s1631 = smul.addr %s1630, 8
    %s1632 = scalar_lea.vmem [#allocation4], %s1631
    %v1633 = vld [vmem:[%s1632] sm:$0xff]
    %v1634 = vld [vmem:[%s1632 + $0x8] sm:$0xff]
    %v1635 = vld [vmem:[%s1632 + $0x10] sm:$0xff]
    %v1636 = vld [vmem:[%s1632 + $0x18] sm:$0xff]
    %1637 = vmatprep.subr.mxu0 %v552
    %1638 = vmatpush1.msra.mxu0 %v551
    %1639 = vmatprep.subr.mxu0 %v548
    %1640 = vmatpush1.msra.mxu0 %v547
    %1641 = vmatprep.subr.mxu0 %v544
    %1642 = vmatpush1.msra.mxu0 %v543
    %1643 = vmatprep.subr.mxu0 %v540
    %1644 = vmatpush1.msra.mxu0 %v539
    %1645 = vmatprep.subr.mxu0 %v536
    %1646 = vmatpush1.msra.mxu0 %v535
    %1647 = vmatprep.subr.mxu0 %v532
    %1648 = vmatpush1.msra.mxu0 %v531
    %1649 = vmatprep.subr.mxu0 %v528
    %1650 = vmatpush1.msra.mxu0 %v527
    %1651 = vmatprep.subr.mxu0 %v524
    %1652 = vmatpush1.msra.mxu0 %v523
    %1653 = vmatprep.subr.mxu0 %v520
    %1654 = vmatpush1.msra.mxu0 %v519
    %1655 = vmatprep.subr.mxu0 %v516
    %1656 = vmatpush1.msra.mxu0 %v515
    %1657 = vmatprep.subr.mxu0 %v512
    %1658 = vmatpush1.msra.mxu0 %v511
    %1659 = vmatprep.subr.mxu0 %v508
    %1660 = vmatpush1.msra.mxu0 %v507
    %1661 = vmatprep.subr.mxu0 %v504
    %1662 = vmatpush1.msra.mxu0 %v503
    %1663 = vmatprep.subr.mxu0 %v500
    %1664 = vmatpush1.msra.mxu0 %v499
    %1665 = vmatprep.subr.mxu0 %v496
    %1666 = vmatpush1.msra.mxu0 %v495
    %1667 = vmatprep.subr.mxu0 %v492
    %1668 = vmatpush1.msra.mxu0 %v491
    %1669 = vmatprep.subr.mxu0 0.0
    %1670 = vmatpush2.msra.mxu0 0.0
    %1671 = vmatprep.subr.mxu0 0.0
    %1672 = vmatpush2.msra.mxu0 0.0
    %1673 = vmatprep.subr.mxu0 0.0
    %1674 = vmatpush2.msra.mxu0 0.0
    %1675 = vmatprep.subr.mxu0 0.0
    %1676 = vmatpush2.msra.mxu0 0.0
    %1677 = vmatprep.subr.mxu0 0.0
    %1678 = vmatpush2.msra.mxu0 0.0
    %1679 = vmatprep.subr.mxu0 0.0
    %1680 = vmatpush2.msra.mxu0 0.0
    %1681 = vmatprep.subr.mxu0 0.0
    %1682 = vmatpush2.msra.mxu0 0.0
    %1683 = vmatprep.subr.mxu0 0.0
    %1684 = vmatpush2.msra.mxu0 0.0
    %1685 = vmatprep.subr.mxu0 0.0
    %1686 = vmatpush2.msra.mxu0 0.0
    %1687 = vmatprep.subr.mxu0 0.0
    %1688 = vmatpush2.msra.mxu0 0.0
    %1689 = vmatprep.subr.mxu0 0.0
    %1690 = vmatpush2.msra.mxu0 0.0
    %1691 = vmatprep.subr.mxu0 0.0
    %1692 = vmatpush2.msra.mxu0 0.0
    %1693 = vmatprep.subr.mxu0 0.0
    %1694 = vmatpush2.msra.mxu0 0.0
    %1695 = vmatprep.subr.mxu0 0.0
    %1696 = vmatpush2.msra.mxu0 0.0
    %1697 = vmatprep.subr.mxu0 0.0
    %1698 = vmatpush2.msra.mxu0 0.0
    %1699 = vmatprep.subr.mxu0 0.0
    %1700 = vmatpush2.msra.mxu0 0.0
    %1701 = vmatprep.mubr.f32.mxu0 0.0
    %1702 = vmatmul.mubr.f32.gmra.mxu0 %v1627
    %v1703 = vpop.f32.mrf.mxu0
    %v1704 = vadd.f32 0.0, %v1703
    %v1705 = vpop.f32.mrf.mxu0
    %v1706 = vadd.f32 0.0, %v1705
    %1707 = vdwg.mxu0
    %1708 = vmatprep.subr.mxu0 %v554
    %1709 = vmatpush1.msra.mxu0 %v553
    %1710 = vmatprep.subr.mxu0 %v550
    %1711 = vmatpush1.msra.mxu0 %v549
    %1712 = vmatprep.subr.mxu0 %v546
    %1713 = vmatpush1.msra.mxu0 %v545
    %1714 = vmatprep.subr.mxu0 %v542
    %1715 = vmatpush1.msra.mxu0 %v541
    %1716 = vmatprep.subr.mxu0 %v538
    %1717 = vmatpush1.msra.mxu0 %v537
    %1718 = vmatprep.subr.mxu0 %v534
    %1719 = vmatpush1.msra.mxu0 %v533
    %1720 = vmatprep.subr.mxu0 %v530
    %1721 = vmatpush1.msra.mxu0 %v529
    %1722 = vmatprep.subr.mxu0 %v526
    %1723 = vmatpush1.msra.mxu0 %v525
    %1724 = vmatprep.subr.mxu0 %v522
    %1725 = vmatpush1.msra.mxu0 %v521
    %1726 = vmatprep.subr.mxu0 %v518
    %1727 = vmatpush1.msra.mxu0 %v517
    %1728 = vmatprep.subr.mxu0 %v514
    %1729 = vmatpush1.msra.mxu0 %v513
    %1730 = vmatprep.subr.mxu0 %v510
    %1731 = vmatpush1.msra.mxu0 %v509
    %1732 = vmatprep.subr.mxu0 %v506
    %1733 = vmatpush1.msra.mxu0 %v505
    %1734 = vmatprep.subr.mxu0 %v502
    %1735 = vmatpush1.msra.mxu0 %v501
    %1736 = vmatprep.subr.mxu0 %v498
    %1737 = vmatpush1.msra.mxu0 %v497
    %1738 = vmatprep.subr.mxu0 %v494
    %1739 = vmatpush1.msra.mxu0 %v493
    %1740 = vmatprep.subr.mxu0 0.0
    %1741 = vmatpush2.msra.mxu0 0.0
    %1742 = vmatprep.subr.mxu0 0.0
    %1743 = vmatpush2.msra.mxu0 0.0
    %1744 = vmatprep.subr.mxu0 0.0
    %1745 = vmatpush2.msra.mxu0 0.0
    %1746 = vmatprep.subr.mxu0 0.0
    %1747 = vmatpush2.msra.mxu0 0.0
    %1748 = vmatprep.subr.mxu0 0.0
    %1749 = vmatpush2.msra.mxu0 0.0
    %1750 = vmatprep.subr.mxu0 0.0
    %1751 = vmatpush2.msra.mxu0 0.0
    %1752 = vmatprep.subr.mxu0 0.0
    %1753 = vmatpush2.msra.mxu0 0.0
    %1754 = vmatprep.subr.mxu0 0.0
    %1755 = vmatpush2.msra.mxu0 0.0
    %1756 = vmatprep.subr.mxu0 0.0
    %1757 = vmatpush2.msra.mxu0 0.0
    %1758 = vmatprep.subr.mxu0 0.0
    %1759 = vmatpush2.msra.mxu0 0.0
    %1760 = vmatprep.subr.mxu0 0.0
    %1761 = vmatpush2.msra.mxu0 0.0
    %1762 = vmatprep.subr.mxu0 0.0
    %1763 = vmatpush2.msra.mxu0 0.0
    %1764 = vmatprep.subr.mxu0 0.0
    %1765 = vmatpush2.msra.mxu0 0.0
    %1766 = vmatprep.subr.mxu0 0.0
    %1767 = vmatpush2.msra.mxu0 0.0
    %1768 = vmatprep.subr.mxu0 0.0
    %1769 = vmatpush2.msra.mxu0 0.0
    %1770 = vmatprep.subr.mxu0 0.0
    %1771 = vmatpush2.msra.mxu0 0.0
    %1772 = vmatprep.mubr.f32.mxu0 0.0
    %1773 = vmatmul.mubr.f32.gmra.mxu0 %v1627
    %v1774 = vpop.f32.mrf.mxu0
    %v1775 = vadd.f32 0.0, %v1774
    %v1776 = vpop.f32.mrf.mxu0
    %v1777 = vadd.f32 0.0, %v1776
    %1778 = vdwg.mxu0
    %v1779 = vadd.f32 %v1633, %v1704
    %v1780 = vadd.f32 %v1634, %v1706
    %v1781 = vadd.f32 %v1635, %v1775
    %v1782 = vadd.f32 %v1636, %v1777
    %v1783 = vxor.u32 %v1779, 2147483648
    %v1784 = vxor.u32 %v1780, 2147483648
    %v1785 = vxor.u32 %v1781, 2147483648
    %v1786 = vmul.f32 %v1783, 1.442695
    %v1787 = vpow.pop %v1786
    %v1788 = vmul.f32 %v1784, 1.442695
    %v1789 = vpow.pop %v1788
    %v1790 = vmul.f32 %v1785, 1.442695
    %v1791 = vpow.pop %v1790
    %v1792 = vadd.f32 %v1787, 1.0
    %v1793 = vadd.f32 %v1789, 1.0
    %v1794 = vadd.f32 %v1791, 1.0
    %v1795 = vrcp.pop %v1792
    %v1796 = vmul.f32 1.0, %v1795
    %v1797 = vrcp.pop %v1793
    %v1798 = vmul.f32 1.0, %v1797
    %v1799 = vrcp.pop %v1794
    %v1800 = vmul.f32 1.0, %v1799
    %v1801 = vtanh.pop %v1782
    %v1802 = vmul.f32 %v1798, %v1625
    %v1803 = vmul.f32 %v1796, %v1801
    %v1804 = vadd.f32 %v1802, %v1803
    %v1805 = vtanh.pop %v1804
    %v1806 = vmul.f32 %v1800, %v1805
    %s1807 = scalar_lea.vmem [#allocation5], 48
    %1808 = vst [vmem:[%s1807] sm:$0xff] %v1806
    %s1809 = smul.u32 7, 4
    %s1810 = smul.addr %s1809, 8
    %s1811 = scalar_lea.vmem [#allocation4], %s1810
    %v1812 = vld [vmem:[%s1811] sm:$0xff]
    %v1813 = vld [vmem:[%s1811 + $0x8] sm:$0xff]
    %v1814 = vld [vmem:[%s1811 + $0x10] sm:$0xff]
    %v1815 = vld [vmem:[%s1811 + $0x18] sm:$0xff]
    %1816 = vmatprep.subr.mxu0 %v552
    %1817 = vmatpush1.msra.mxu0 %v551
    %1818 = vmatprep.subr.mxu0 %v548
    %1819 = vmatpush1.msra.mxu0 %v547
    %1820 = vmatprep.subr.mxu0 %v544
    %1821 = vmatpush1.msra.mxu0 %v543
    %1822 = vmatprep.subr.mxu0 %v540
    %1823 = vmatpush1.msra.mxu0 %v539
    %1824 = vmatprep.subr.mxu0 %v536
    %1825 = vmatpush1.msra.mxu0 %v535
    %1826 = vmatprep.subr.mxu0 %v532
    %1827 = vmatpush1.msra.mxu0 %v531
    %1828 = vmatprep.subr.mxu0 %v528
    %1829 = vmatpush1.msra.mxu0 %v527
    %1830 = vmatprep.subr.mxu0 %v524
    %1831 = vmatpush1.msra.mxu0 %v523
    %1832 = vmatprep.subr.mxu0 %v520
    %1833 = vmatpush1.msra.mxu0 %v519
    %1834 = vmatprep.subr.mxu0 %v516
    %1835 = vmatpush1.msra.mxu0 %v515
    %1836 = vmatprep.subr.mxu0 %v512
    %1837 = vmatpush1.msra.mxu0 %v511
    %1838 = vmatprep.subr.mxu0 %v508
    %1839 = vmatpush1.msra.mxu0 %v507
    %1840 = vmatprep.subr.mxu0 %v504
    %1841 = vmatpush1.msra.mxu0 %v503
    %1842 = vmatprep.subr.mxu0 %v500
    %1843 = vmatpush1.msra.mxu0 %v499
    %1844 = vmatprep.subr.mxu0 %v496
    %1845 = vmatpush1.msra.mxu0 %v495
    %1846 = vmatprep.subr.mxu0 %v492
    %1847 = vmatpush1.msra.mxu0 %v491
    %1848 = vmatprep.subr.mxu0 0.0
    %1849 = vmatpush2.msra.mxu0 0.0
    %1850 = vmatprep.subr.mxu0 0.0
    %1851 = vmatpush2.msra.mxu0 0.0
    %1852 = vmatprep.subr.mxu0 0.0
    %1853 = vmatpush2.msra.mxu0 0.0
    %1854 = vmatprep.subr.mxu0 0.0
    %1855 = vmatpush2.msra.mxu0 0.0
    %1856 = vmatprep.subr.mxu0 0.0
    %1857 = vmatpush2.msra.mxu0 0.0
    %1858 = vmatprep.subr.mxu0 0.0
    %1859 = vmatpush2.msra.mxu0 0.0
    %1860 = vmatprep.subr.mxu0 0.0
    %1861 = vmatpush2.msra.mxu0 0.0
    %1862 = vmatprep.subr.mxu0 0.0
    %1863 = vmatpush2.msra.mxu0 0.0
    %1864 = vmatprep.subr.mxu0 0.0
    %1865 = vmatpush2.msra.mxu0 0.0
    %1866 = vmatprep.subr.mxu0 0.0
    %1867 = vmatpush2.msra.mxu0 0.0
    %1868 = vmatprep.subr.mxu0 0.0
    %1869 = vmatpush2.msra.mxu0 0.0
    %1870 = vmatprep.subr.mxu0 0.0
    %1871 = vmatpush2.msra.mxu0 0.0
    %1872 = vmatprep.subr.mxu0 0.0
    %1873 = vmatpush2.msra.mxu0 0.0
    %1874 = vmatprep.subr.mxu0 0.0
    %1875 = vmatpush2.msra.mxu0 0.0
    %1876 = vmatprep.subr.mxu0 0.0
    %1877 = vmatpush2.msra.mxu0 0.0
    %1878 = vmatprep.subr.mxu0 0.0
    %1879 = vmatpush2.msra.mxu0 0.0
    %1880 = vmatprep.mubr.f32.mxu0 0.0
    %1881 = vmatmul.mubr.f32.gmra.mxu0 %v1806
    %v1882 = vpop.f32.mrf.mxu0
    %v1883 = vadd.f32 0.0, %v1882
    %v1884 = vpop.f32.mrf.mxu0
    %v1885 = vadd.f32 0.0, %v1884
    %1886 = vdwg.mxu0
    %1887 = vmatprep.subr.mxu0 %v554
    %1888 = vmatpush1.msra.mxu0 %v553
    %1889 = vmatprep.subr.mxu0 %v550
    %1890 = vmatpush1.msra.mxu0 %v549
    %1891 = vmatprep.subr.mxu0 %v546
    %1892 = vmatpush1.msra.mxu0 %v545
    %1893 = vmatprep.subr.mxu0 %v542
    %1894 = vmatpush1.msra.mxu0 %v541
    %1895 = vmatprep.subr.mxu0 %v538
    %1896 = vmatpush1.msra.mxu0 %v537
    %1897 = vmatprep.subr.mxu0 %v534
    %1898 = vmatpush1.msra.mxu0 %v533
    %1899 = vmatprep.subr.mxu0 %v530
    %1900 = vmatpush1.msra.mxu0 %v529
    %1901 = vmatprep.subr.mxu0 %v526
    %1902 = vmatpush1.msra.mxu0 %v525
    %1903 = vmatprep.subr.mxu0 %v522
    %1904 = vmatpush1.msra.mxu0 %v521
    %1905 = vmatprep.subr.mxu0 %v518
    %1906 = vmatpush1.msra.mxu0 %v517
    %1907 = vmatprep.subr.mxu0 %v514
    %1908 = vmatpush1.msra.mxu0 %v513
    %1909 = vmatprep.subr.mxu0 %v510
    %1910 = vmatpush1.msra.mxu0 %v509
    %1911 = vmatprep.subr.mxu0 %v506
    %1912 = vmatpush1.msra.mxu0 %v505
    %1913 = vmatprep.subr.mxu0 %v502
    %1914 = vmatpush1.msra.mxu0 %v501
    %1915 = vmatprep.subr.mxu0 %v498
    %1916 = vmatpush1.msra.mxu0 %v497
    %1917 = vmatprep.subr.mxu0 %v494
    %1918 = vmatpush1.msra.mxu0 %v493
    %1919 = vmatprep.subr.mxu0 0.0
    %1920 = vmatpush2.msra.mxu0 0.0
    %1921 = vmatprep.subr.mxu0 0.0
    %1922 = vmatpush2.msra.mxu0 0.0
    %1923 = vmatprep.subr.mxu0 0.0
    %1924 = vmatpush2.msra.mxu0 0.0
    %1925 = vmatprep.subr.mxu0 0.0
    %1926 = vmatpush2.msra.mxu0 0.0
    %1927 = vmatprep.subr.mxu0 0.0
    %1928 = vmatpush2.msra.mxu0 0.0
    %1929 = vmatprep.subr.mxu0 0.0
    %1930 = vmatpush2.msra.mxu0 0.0
    %1931 = vmatprep.subr.mxu0 0.0
    %1932 = vmatpush2.msra.mxu0 0.0
    %1933 = vmatprep.subr.mxu0 0.0
    %1934 = vmatpush2.msra.mxu0 0.0
    %1935 = vmatprep.subr.mxu0 0.0
    %1936 = vmatpush2.msra.mxu0 0.0
    %1937 = vmatprep.subr.mxu0 0.0
    %1938 = vmatpush2.msra.mxu0 0.0
    %1939 = vmatprep.subr.mxu0 0.0
    %1940 = vmatpush2.msra.mxu0 0.0
    %1941 = vmatprep.subr.mxu0 0.0
    %1942 = vmatpush2.msra.mxu0 0.0
    %1943 = vmatprep.subr.mxu0 0.0
    %1944 = vmatpush2.msra.mxu0 0.0
    %1945 = vmatprep.subr.mxu0 0.0
    %1946 = vmatpush2.msra.mxu0 0.0
    %1947 = vmatprep.subr.mxu0 0.0
    %1948 = vmatpush2.msra.mxu0 0.0
    %1949 = vmatprep.subr.mxu0 0.0
    %1950 = vmatpush2.msra.mxu0 0.0
    %1951 = vmatprep.mubr.f32.mxu0 0.0
    %1952 = vmatmul.mubr.f32.gmra.mxu0 %v1806
    %v1953 = vpop.f32.mrf.mxu0
    %v1954 = vadd.f32 0.0, %v1953
    %v1955 = vpop.f32.mrf.mxu0
    %v1956 = vadd.f32 0.0, %v1955
    %1957 = vdwg.mxu0
    %v1958 = vadd.f32 %v1812, %v1883
    %v1959 = vadd.f32 %v1813, %v1885
    %v1960 = vadd.f32 %v1814, %v1954
    %v1961 = vadd.f32 %v1815, %v1956
    %v1962 = vxor.u32 %v1958, 2147483648
    %v1963 = vxor.u32 %v1959, 2147483648
    %v1964 = vxor.u32 %v1960, 2147483648
    %v1965 = vmul.f32 %v1962, 1.442695
    %v1966 = vpow.pop %v1965
    %v1967 = vmul.f32 %v1963, 1.442695
    %v1968 = vpow.pop %v1967
    %v1969 = vmul.f32 %v1964, 1.442695
    %v1970 = vpow.pop %v1969
    %v1971 = vadd.f32 %v1966, 1.0
    %v1972 = vadd.f32 %v1968, 1.0
    %v1973 = vadd.f32 %v1970, 1.0
    %v1974 = vrcp.pop %v1971
    %v1975 = vmul.f32 1.0, %v1974
    %v1976 = vrcp.pop %v1972
    %v1977 = vmul.f32 1.0, %v1976
    %v1978 = vrcp.pop %v1973
    %v1979 = vmul.f32 1.0, %v1978
    %v1980 = vtanh.pop %v1961
    %v1981 = vmul.f32 %v1977, %v1804
    %v1982 = vmul.f32 %v1975, %v1980
    %v1983 = vadd.f32 %v1981, %v1982
    %v1984 = vtanh.pop %v1983
    %v1985 = vmul.f32 %v1979, %v1984
    %s1986 = scalar_lea.vmem [#allocation5], 56
    %1987 = vst [vmem:[%s1986] sm:$0xff] %v1985
    %1988 = vst [vmem:[#allocation2] sm:$0xff] %v1985
    %1989 = vst [vmem:[#allocation3] sm:$0xff] %v1983
    %v1990 = vld [vmem:[#allocation5] sm:$0xff]
    %v1991 = vld [vmem:[#allocation5 + $0x8] sm:$0xff]
    %v1992 = vld [vmem:[#allocation5 + $0x10] sm:$0xff]
    %v1993 = vld [vmem:[#allocation5 + $0x18] sm:$0xff]
    %v1994 = vld [vmem:[#allocation5 + $0x20] sm:$0xff]
    %v1995 = vld [vmem:[#allocation5 + $0x28] sm:$0xff]
    %v1996 = vld [vmem:[#allocation5 + $0x30] sm:$0xff]
    %v1997 = vld [vmem:[#allocation5 + $0x38] sm:$0xff]
    %v1998 = vld [vmem:[#allocation15] sm:$0xff]
    %v1999 = vld [vmem:[#allocation15 + $0x8] sm:$0xff]
    %v2000 = vld [vmem:[#allocation15 + $0x10] sm:$0xff]
    %v2001 = vld [vmem:[#allocation15 + $0x18] sm:$0xff]
    %v2002 = vld [vmem:[#allocation15 + $0x20] sm:$0xff]
    %v2003 = vld [vmem:[#allocation15 + $0x28] sm:$0xff]
    %v2004 = vld [vmem:[#allocation15 + $0x30] sm:$0xff]
    %v2005 = vld [vmem:[#allocation15 + $0x38] sm:$0xff]
    %v2006 = vld [vmem:[#allocation15 + $0x40] sm:$0xff]
    %v2007 = vld [vmem:[#allocation15 + $0x48] sm:$0xff]
    %v2008 = vld [vmem:[#allocation15 + $0x50] sm:$0xff]
    %v2009 = vld [vmem:[#allocation15 + $0x58] sm:$0xff]
    %v2010 = vld [vmem:[#allocation15 + $0x60] sm:$0xff]
    %v2011 = vld [vmem:[#allocation15 + $0x68] sm:$0xff]
    %v2012 = vld [vmem:[#allocation15 + $0x70] sm:$0xff]
    %v2013 = vld [vmem:[#allocation15 + $0x78] sm:$0xff]
    %v2014 = vld [vmem:[%s7] sm:$0x1]
    %v2016 = vlaneseq
    %v2017 = vshrl.u32 %v2016, 7
    %v2018 = vsub.s32 0, %v2017
    %v2019 = vrot.slane %v2014, %v2018
    %2021 = vmatprep.subr.mxu0 0.0
    %2022 = vmatpush1.msra.mxu0 %v2013
    %2023 = vmatprep.subr.mxu0 0.0
    %2024 = vmatpush1.msra.mxu0 %v2012
    %2025 = vmatprep.subr.mxu0 0.0
    %2026 = vmatpush1.msra.mxu0 %v2011
    %2027 = vmatprep.subr.mxu0 0.0
    %2028 = vmatpush1.msra.mxu0 %v2010
    %2029 = vmatprep.subr.mxu0 0.0
    %2030 = vmatpush1.msra.mxu0 %v2009
    %2031 = vmatprep.subr.mxu0 0.0
    %2032 = vmatpush1.msra.mxu0 %v2008
    %2033 = vmatprep.subr.mxu0 0.0
    %2034 = vmatpush1.msra.mxu0 %v2007
    %2035 = vmatprep.subr.mxu0 0.0
    %2036 = vmatpush1.msra.mxu0 %v2006
    %2037 = vmatprep.subr.mxu0 0.0
    %2038 = vmatpush1.msra.mxu0 %v2005
    %2039 = vmatprep.subr.mxu0 0.0
    %2040 = vmatpush1.msra.mxu0 %v2004
    %2041 = vmatprep.subr.mxu0 0.0
    %2042 = vmatpush1.msra.mxu0 %v2003
    %2043 = vmatprep.subr.mxu0 0.0
    %2044 = vmatpush1.msra.mxu0 %v2002
    %2045 = vmatprep.subr.mxu0 0.0
    %2046 = vmatpush1.msra.mxu0 %v2001
    %2047 = vmatprep.subr.mxu0 0.0
    %2048 = vmatpush1.msra.mxu0 %v2000
    %2049 = vmatprep.subr.mxu0 0.0
    %2050 = vmatpush1.msra.mxu0 %v1999
    %2051 = vmatprep.subr.mxu0 0.0
    %2052 = vmatpush1.msra.mxu0 %v1998
    %2053 = vmatprep.subr.mxu0 0.0
    %2054 = vmatpush2.msra.mxu0 0.0
    %2055 = vmatprep.subr.mxu0 0.0
    %2056 = vmatpush2.msra.mxu0 0.0
    %2057 = vmatprep.subr.mxu0 0.0
    %2058 = vmatpush2.msra.mxu0 0.0
    %2059 = vmatprep.subr.mxu0 0.0
    %2060 = vmatpush2.msra.mxu0 0.0
    %2061 = vmatprep.subr.mxu0 0.0
    %2062 = vmatpush2.msra.mxu0 0.0
    %2063 = vmatprep.subr.mxu0 0.0
    %2064 = vmatpush2.msra.mxu0 0.0
    %2065 = vmatprep.subr.mxu0 0.0
    %2066 = vmatpush2.msra.mxu0 0.0
    %2067 = vmatprep.subr.mxu0 0.0
    %2068 = vmatpush2.msra.mxu0 0.0
    %2069 = vmatprep.subr.mxu0 0.0
    %2070 = vmatpush2.msra.mxu0 0.0
    %2071 = vmatprep.subr.mxu0 0.0
    %2072 = vmatpush2.msra.mxu0 0.0
    %2073 = vmatprep.subr.mxu0 0.0
    %2074 = vmatpush2.msra.mxu0 0.0
    %2075 = vmatprep.subr.mxu0 0.0
    %2076 = vmatpush2.msra.mxu0 0.0
    %2077 = vmatprep.subr.mxu0 0.0
    %2078 = vmatpush2.msra.mxu0 0.0
    %2079 = vmatprep.subr.mxu0 0.0
    %2080 = vmatpush2.msra.mxu0 0.0
    %2081 = vmatprep.subr.mxu0 0.0
    %2082 = vmatpush2.msra.mxu0 0.0
    %2083 = vmatprep.subr.mxu0 0.0
    %2084 = vmatpush2.msra.mxu0 0.0
    %2085 = vmatprep.mubr.f32.mxu0 0.0
    %2086 = vmatmul.mubr.f32.gmra.mxu0 %v1990
    %v2087 = vpop.f32.mrf.mxu0
    %v2088 = vadd.f32 %v2019, %v2087
    %v2089 = vpop.f32.mrf.mxu0
    %2090 = vmatprep.mubr.f32.mxu0 0.0
    %2091 = vmatmul.mubr.f32.gmra.mxu0 %v1991
    %v2092 = vpop.f32.mrf.mxu0
    %v2093 = vadd.f32 %v2019, %v2092
    %v2094 = vpop.f32.mrf.mxu0
    %2095 = vmatprep.mubr.f32.mxu0 0.0
    %2096 = vmatmul.mubr.f32.gmra.mxu0 %v1992
    %v2097 = vpop.f32.mrf.mxu0
    %v2098 = vadd.f32 %v2019, %v2097
    %v2099 = vpop.f32.mrf.mxu0
    %2100 = vmatprep.mubr.f32.mxu0 0.0
    %2101 = vmatmul.mubr.f32.gmra.mxu0 %v1993
    %v2102 = vpop.f32.mrf.mxu0
    %v2103 = vadd.f32 %v2019, %v2102
    %v2104 = vpop.f32.mrf.mxu0
    %2105 = vmatprep.mubr.f32.mxu0 0.0
    %2106 = vmatmul.mubr.f32.gmra.mxu0 %v1994
    %v2107 = vpop.f32.mrf.mxu0
    %v2108 = vadd.f32 %v2019, %v2107
    %v2109 = vpop.f32.mrf.mxu0
    %2110 = vmatprep.mubr.f32.mxu0 0.0
    %2111 = vmatmul.mubr.f32.gmra.mxu0 %v1995
    %v2112 = vpop.f32.mrf.mxu0
    %v2113 = vadd.f32 %v2019, %v2112
    %v2114 = vpop.f32.mrf.mxu0
    %2115 = vmatprep.mubr.f32.mxu0 0.0
    %2116 = vmatmul.mubr.f32.gmra.mxu0 %v1996
    %v2117 = vpop.f32.mrf.mxu0
    %v2118 = vadd.f32 %v2019, %v2117
    %v2119 = vpop.f32.mrf.mxu0
    %2120 = vmatprep.mubr.f32.mxu0 0.0
    %2121 = vmatmul.mubr.f32.gmra.mxu0 %v1997
    %v2122 = vpop.f32.mrf.mxu0
    %v2123 = vadd.f32 %v2019, %v2122
    %v2124 = vpop.f32.mrf.mxu0
    %2125 = vdwg.mxu0
    %v2126 = vmax.f32 %v2088, 0.0
    %v2127 = vmax.f32 %v2093, 0.0
    %v2128 = vmax.f32 %v2098, 0.0
    %v2129 = vmax.f32 %v2103, 0.0
    %v2130 = vmax.f32 %v2108, 0.0
    %v2131 = vmax.f32 %v2113, 0.0
    %v2132 = vmax.f32 %v2118, 0.0
    %v2133 = vmax.f32 %v2123, 0.0
    %v2134 = vld [vmem:[#allocation17] sm:$0xff]
    %v2135 = vld [vmem:[#allocation17 + $0x8] sm:$0xff]
    %v2136 = vld [vmem:[#allocation17 + $0x10] sm:$0xff]
    %v2137 = vld [vmem:[#allocation17 + $0x18] sm:$0xff]
    %v2138 = vld [vmem:[#allocation17 + $0x20] sm:$0xff]
    %v2139 = vld [vmem:[#allocation17 + $0x28] sm:$0xff]
    %v2140 = vld [vmem:[#allocation17 + $0x30] sm:$0xff]
    %v2141 = vld [vmem:[#allocation17 + $0x38] sm:$0xff]
    %v2142 = vld [vmem:[#allocation17 + $0x40] sm:$0xff]
    %v2143 = vld [vmem:[#allocation17 + $0x48] sm:$0xff]
    %v2144 = vld [vmem:[#allocation17 + $0x50] sm:$0xff]
    %v2145 = vld [vmem:[#allocation17 + $0x58] sm:$0xff]
    %v2146 = vld [vmem:[#allocation17 + $0x60] sm:$0xff]
    %v2147 = vld [vmem:[#allocation17 + $0x68] sm:$0xff]
    %v2148 = vld [vmem:[#allocation17 + $0x70] sm:$0xff]
    %v2149 = vld [vmem:[#allocation17 + $0x78] sm:$0xff]
    %v2150 = vld [vmem:[%s9] sm:$0x1]
    %v2152 = vlaneseq
    %v2153 = vshrl.u32 %v2152, 7
    %v2154 = vsub.s32 0, %v2153
    %v2155 = vrot.slane %v2150, %v2154
    %2157 = vmatprep.subr.mxu0 0.0
    %2158 = vmatpush1.msra.mxu0 %v2149
    %2159 = vmatprep.subr.mxu0 0.0
    %2160 = vmatpush1.msra.mxu0 %v2148
    %2161 = vmatprep.subr.mxu0 0.0
    %2162 = vmatpush1.msra.mxu0 %v2147
    %2163 = vmatprep.subr.mxu0 0.0
    %2164 = vmatpush1.msra.mxu0 %v2146
    %2165 = vmatprep.subr.mxu0 0.0
    %2166 = vmatpush1.msra.mxu0 %v2145
    %2167 = vmatprep.subr.mxu0 0.0
    %2168 = vmatpush1.msra.mxu0 %v2144
    %2169 = vmatprep.subr.mxu0 0.0
    %2170 = vmatpush1.msra.mxu0 %v2143
    %2171 = vmatprep.subr.mxu0 0.0
    %2172 = vmatpush1.msra.mxu0 %v2142
    %2173 = vmatprep.subr.mxu0 0.0
    %2174 = vmatpush1.msra.mxu0 %v2141
    %2175 = vmatprep.subr.mxu0 0.0
    %2176 = vmatpush1.msra.mxu0 %v2140
    %2177 = vmatprep.subr.mxu0 0.0
    %2178 = vmatpush1.msra.mxu0 %v2139
    %2179 = vmatprep.subr.mxu0 0.0
    %2180 = vmatpush1.msra.mxu0 %v2138
    %2181 = vmatprep.subr.mxu0 0.0
    %2182 = vmatpush1.msra.mxu0 %v2137
    %2183 = vmatprep.subr.mxu0 0.0
    %2184 = vmatpush1.msra.mxu0 %v2136
    %2185 = vmatprep.subr.mxu0 0.0
    %2186 = vmatpush1.msra.mxu0 %v2135
    %2187 = vmatprep.subr.mxu0 0.0
    %2188 = vmatpush1.msra.mxu0 %v2134
    %2189 = vmatprep.subr.mxu0 0.0
    %2190 = vmatpush2.msra.mxu0 0.0
    %2191 = vmatprep.subr.mxu0 0.0
    %2192 = vmatpush2.msra.mxu0 0.0
    %2193 = vmatprep.subr.mxu0 0.0
    %2194 = vmatpush2.msra.mxu0 0.0
    %2195 = vmatprep.subr.mxu0 0.0
    %2196 = vmatpush2.msra.mxu0 0.0
    %2197 = vmatprep.subr.mxu0 0.0
    %2198 = vmatpush2.msra.mxu0 0.0
    %2199 = vmatprep.subr.mxu0 0.0
    %2200 = vmatpush2.msra.mxu0 0.0
    %2201 = vmatprep.subr.mxu0 0.0
    %2202 = vmatpush2.msra.mxu0 0.0
    %2203 = vmatprep.subr.mxu0 0.0
    %2204 = vmatpush2.msra.mxu0 0.0
    %2205 = vmatprep.subr.mxu0 0.0
    %2206 = vmatpush2.msra.mxu0 0.0
    %2207 = vmatprep.subr.mxu0 0.0
    %2208 = vmatpush2.msra.mxu0 0.0
    %2209 = vmatprep.subr.mxu0 0.0
    %2210 = vmatpush2.msra.mxu0 0.0
    %2211 = vmatprep.subr.mxu0 0.0
    %2212 = vmatpush2.msra.mxu0 0.0
    %2213 = vmatprep.subr.mxu0 0.0
    %2214 = vmatpush2.msra.mxu0 0.0
    %2215 = vmatprep.subr.mxu0 0.0
    %2216 = vmatpush2.msra.mxu0 0.0
    %2217 = vmatprep.subr.mxu0 0.0
    %2218 = vmatpush2.msra.mxu0 0.0
    %2219 = vmatprep.subr.mxu0 0.0
    %2220 = vmatpush2.msra.mxu0 0.0
    %2221 = vmatprep.mubr.f32.mxu0 0.0
    %2222 = vmatmul.mubr.f32.gmra.mxu0 %v2126
    %v2223 = vpop.f32.mrf.mxu0
    %v2224 = vadd.f32 %v2155, %v2223
    %v2225 = vpop.f32.mrf.mxu0
    %2226 = vmatprep.mubr.f32.mxu0 0.0
    %2227 = vmatmul.mubr.f32.gmra.mxu0 %v2127
    %v2228 = vpop.f32.mrf.mxu0
    %v2229 = vadd.f32 %v2155, %v2228
    %v2230 = vpop.f32.mrf.mxu0
    %2231 = vmatprep.mubr.f32.mxu0 0.0
    %2232 = vmatmul.mubr.f32.gmra.mxu0 %v2128
    %v2233 = vpop.f32.mrf.mxu0
    %v2234 = vadd.f32 %v2155, %v2233
    %v2235 = vpop.f32.mrf.mxu0
    %2236 = vmatprep.mubr.f32.mxu0 0.0
    %2237 = vmatmul.mubr.f32.gmra.mxu0 %v2129
    %v2238 = vpop.f32.mrf.mxu0
    %v2239 = vadd.f32 %v2155, %v2238
    %v2240 = vpop.f32.mrf.mxu0
    %2241 = vmatprep.mubr.f32.mxu0 0.0
    %2242 = vmatmul.mubr.f32.gmra.mxu0 %v2130
    %v2243 = vpop.f32.mrf.mxu0
    %v2244 = vadd.f32 %v2155, %v2243
    %v2245 = vpop.f32.mrf.mxu0
    %2246 = vmatprep.mubr.f32.mxu0 0.0
    %2247 = vmatmul.mubr.f32.gmra.mxu0 %v2131
    %v2248 = vpop.f32.mrf.mxu0
    %v2249 = vadd.f32 %v2155, %v2248
    %v2250 = vpop.f32.mrf.mxu0
    %2251 = vmatprep.mubr.f32.mxu0 0.0
    %2252 = vmatmul.mubr.f32.gmra.mxu0 %v2132
    %v2253 = vpop.f32.mrf.mxu0
    %v2254 = vadd.f32 %v2155, %v2253
    %v2255 = vpop.f32.mrf.mxu0
    %2256 = vmatprep.mubr.f32.mxu0 0.0
    %2257 = vmatmul.mubr.f32.gmra.mxu0 %v2133
    %v2258 = vpop.f32.mrf.mxu0
    %v2259 = vadd.f32 %v2155, %v2258
    %v2260 = vpop.f32.mrf.mxu0
    %2261 = vdwg.mxu0
    %2262 = vst [vmem:[#allocation18] sm:$0xff] %v2224
    %2263 = vst [vmem:[#allocation18 + $0x8] sm:$0xff] %v2229
    %2264 = vst [vmem:[#allocation18 + $0x10] sm:$0xff] %v2234
    %2265 = vst [vmem:[#allocation18 + $0x18] sm:$0xff] %v2239
    %2266 = vst [vmem:[#allocation18 + $0x20] sm:$0xff] %v2244
    %2267 = vst [vmem:[#allocation18 + $0x28] sm:$0xff] %v2249
    %2268 = vst [vmem:[#allocation18 + $0x30] sm:$0xff] %v2254
    %2269 = vst [vmem:[#allocation18 + $0x38] sm:$0xff] %v2259
    // Predicated region
    $region74: #{tpu_custom_call.1} parent=1 // pred_check
      %p2270 = pneg %p131
    $region75: #{tpu_custom_call.1} parent=1 // pred_check_branch
      %2272 = sbr.rel (%p2270) target = $region77
    $region76: #{tpu_custom_call.1} parent=1 // pred_region
      %2273 = vst [vmem:[#allocation19] sm:$0xff] %v1985
      %2274 = vst [vmem:[#allocation21] sm:$0xff] %v1983
    $region77: #{tpu_custom_call.1} parent=1 // pred_fallthru
      _
    // Predicated region
    $region78: #{tpu_custom_call.1} parent=1 // pred_check
      _
    $region79: #{tpu_custom_call.1} parent=1 // pred_check_branch
      %2276 = sbr.rel (0) target = $region81
    $region80: #{tpu_custom_call.1} parent=1 // pred_region
      %s2278 = ssub.s32 1024, 1024
      %2279 = vsyncadd [#allocation8], %s2278
      %s2280 = sshll.u32 [#allocation18], 4
      %s2281 = int_to_ptr.vmem [resolvable:$true] %s2280
      %2286 = dma.vmem_to_hbm [thread:$0]  %s2281, 1024, %s10, [#allocation8], 128, 128, 8
    $region81: #{tpu_custom_call.1} parent=1 // pred_fallthru
      _
    // Predicated region
    $region82: #{tpu_custom_call.1} parent=1 // pred_check
      _
    $region83: #{tpu_custom_call.1} parent=1 // pred_check_branch
      %2288 = sbr.rel (0) target = $region85
    $region84: #{tpu_custom_call.1} parent=1 // pred_region
      %s2290 = ssub.s32 128, 128
      %2291 = vsyncadd [#allocation20], %s2290
      %s2293 = sshll.u32 [#allocation19], 4
      %s2294 = int_to_ptr.vmem [resolvable:$true] %s2293
      %2296 = dma.vmem_to_hbm [thread:$0]  %s2294, 128, %s11, [#allocation20]
    $region85: #{tpu_custom_call.1} parent=1 // pred_fallthru
      _
    // Predicated region
    $region86: #{tpu_custom_call.1} parent=1 // pred_check
      _
    $region87: #{tpu_custom_call.1} parent=1 // pred_check_branch
      %2298 = sbr.rel (0) target = $region89
    $region88: #{tpu_custom_call.1} parent=1 // pred_region
      %s2300 = ssub.s32 128, 128
      %2301 = vsyncadd [#allocation20], %s2300
      %s2303 = sshll.u32 [#allocation21], 4
      %s2304 = int_to_ptr.vmem [resolvable:$true] %s2303
      %2306 = dma.vmem_to_hbm [thread:$0]  %s2304, 128, %s12, [#allocation20]
    $region89: #{tpu_custom_call.1} parent=1 // pred_fallthru
      _
    // Predicated region
    $region90: #{tpu_custom_call.1} parent=1 // pred_check
      _
    $region91: #{tpu_custom_call.1} parent=1 // pred_check_branch
      %2308 = sbr.rel (0) target = $region93
    $region92: #{tpu_custom_call.1} parent=1 // pred_region
      %2309 = dma.done [#allocation8], 1024
    $region93: #{tpu_custom_call.1} parent=1 // pred_fallthru
      _
    // Predicated region
    $region94: #{tpu_custom_call.1} parent=1 // pred_check
      _
    $region95: #{tpu_custom_call.1} parent=1 // pred_check_branch
      %2311 = sbr.rel (0) target = $region97
    $region96: #{tpu_custom_call.1} parent=1 // pred_region
      %2312 = dma.done [#allocation20], 128
    $region97: #{tpu_custom_call.1} parent=1 // pred_fallthru
      _
    // Predicated region
    $region98: #{tpu_custom_call.1} parent=1 // pred_check
      _
    $region99: #{tpu_custom_call.1} parent=1 // pred_check_branch
      %2314 = sbr.rel (0) target = $region101
    $region100: #{tpu_custom_call.1} parent=1 // pred_region
      %2315 = dma.done [#allocation20], 128
    $region101: #{tpu_custom_call.1} parent=1 // pred_fallthru
      _
    %2316 = vsyncpa [#allocation7], 1
    %2317 = vsyncpa [#allocation10], 1
    %2318 = vsyncpa [#allocation13], 1
    %2319 = vsyncpa [#allocation16], 1
    %2320 = vsyncpa [#allocation8], 1
    %2321 = vsyncpa [#allocation20], 1

</llo_original>
